<compile_context>
chip_gen: v6e
topology: v6e:2x2x1
jax: 0.10.0
libtpu: 0.0.40
codegen_flags: <defaults>
</compile_context>

<pallas_src>
import functools

import jax
import jax.numpy as jnp
from jax.experimental import pallas as pl
from jax.experimental.pallas import tpu as pltpu

LANE = 128


def _round_up(n, m):
    return (n + m - 1) // m * m


def _choose_time_tile(L, target=512):
    """Largest multiple-of-8 divisor of L that is <= target; else the full L."""
    cands = [d for d in range(8, min(L, target) + 1, 8) if L % d == 0]
    return max(cands) if cands else L


def temporal_block_kernel(*refs, K, dilation, has_downsample):
    # Refs (per grid step (b, t)):
    #   x_ref:  (1, TL, Cin_p)  f32   time tile of one batch element
    #   w1_ref: (K*Cin_p, Cout_p) bf16  taps concatenated along contraction dim
    #   b1_ref: (1, Cout_p)     f32
    #   w2_ref: (K*Cout_p, Cout_p) bf16
    #   b2_ref: (1, Cout_p)     f32
    #   [wd_ref: (Cin_p, Cout_p) bf16, bd_ref: (1, Cout_p) f32]  (only if downsample)
    #   o_ref:  (1, TL, Cout_p) f32
    #   xc_ref / hc_ref: bf16 causal-halo carries (pad, C) persisting across tiles
    if has_downsample:
        (x_ref, w1_ref, b1_ref, w2_ref, b2_ref,
         wd_ref, bd_ref, o_ref, xc_ref, hc_ref) = refs
    else:
        (x_ref, w1_ref, b1_ref, w2_ref, b2_ref,
         o_ref, xc_ref, hc_ref) = refs
        wd_ref = bd_ref = None

    t = pl.program_id(1)
    pad = (K - 1) * dilation

    x_cur = x_ref[0]                                   # (TL, Cin_p) f32
    TL = x_cur.shape[0]
    x_bf = x_cur.astype(jnp.bfloat16)                  # one (TL, C) cast

    if pad > 0:
        @pl.when(t == 0)
        def _():   # start of a new sequence: causal context is zero
            xc_ref[...] = jnp.zeros_like(xc_ref)
            hc_ref[...] = jnp.zeros_like(hc_ref)
        x_ext = jnp.concatenate([xc_ref[...], x_bf], axis=0)     # (pad+TL, Cin_p) bf16
    else:
        x_ext = x_bf

    # ---- conv1 (causal dilated, chomped) as ONE matmul + bias + ReLU ----
    taps1 = [x_ext[k * dilation: k * dilation + TL, :] for k in range(K)]
    x_cat = taps1[0] if K == 1 else jnp.concatenate(taps1, axis=-1)
    h = jnp.dot(x_cat, w1_ref[...],
                preferred_element_type=jnp.float32) + b1_ref[...]
    h = jnp.maximum(h, 0.0)                            # (TL, Cout_p) f32
    # TODO(synk): dropout1/dropout2 are identity here (inference semantics).
    h_bf = h.astype(jnp.bfloat16)                      # one (TL, C) cast

    if pad > 0:
        h_ext = jnp.concatenate([hc_ref[...], h_bf], axis=0)      # (pad+TL, Cout_p) bf16
        # update carries for the next time tile (values above already loaded)
        xc_ref[...] = x_ext[TL:, :]
        hc_ref[...] = h_ext[TL:, :]
    else:
        h_ext = h_bf

    # ---- conv2 (causal dilated) as ONE matmul + bias + ReLU ----
    taps2 = [h_ext[k * dilation: k * dilation + TL, :] for k in range(K)]
    h_cat = taps2[0] if K == 1 else jnp.concatenate(taps2, axis=-1)
    out = jnp.dot(h_cat, w2_ref[...],
                  preferred_element_type=jnp.float32) + b2_ref[...]
    out = jnp.maximum(out, 0.0)

    # ---- residual (1x1 conv if channel counts differ) + final ReLU ----
    if has_downsample:
        res = jnp.dot(x_bf, wd_ref[...],
                      preferred_element_type=jnp.float32) + bd_ref[...]
    else:
        res = x_cur
    o_ref[0] = jnp.maximum(out + res, 0.0).astype(o_ref.dtype)


def temporal_block(x, w1, b1, w2, b2, wd, bd, *, K, dilation, time_tile=None):
    """One fused TemporalBlock.

    x:  (N, L, Cin_p) f32, channels already zero-padded to a multiple of 128.
    w1: (K, Cin, Cout), b1: (Cout,), w2: (K, Cout, Cout), b2: (Cout,)
    wd: (Cin, Cout) or None, bd: (Cout,) or None
    Returns (N, L, Cout_p) f32 with Cout_p = round_up(Cout, 128); padded
    channel columns are exactly zero.
    """
    N, L, Cin_p = x.shape
    Cin, Cout = w1.shape[1], w1.shape[2]
    Cout_p = _round_up(Cout, LANE)
    pad = (K - 1) * dilation

    # Lane-dense, MXU-friendly weights: zero-pad channels to 128 lanes, fold
    # the K taps into the contraction dim, pre-cast to bf16 for the MXU.
    w1p = jnp.zeros((K, Cin_p, Cout_p), jnp.float32).at[:, :Cin, :Cout].set(w1)
    w1_cat = w1p.reshape(K * Cin_p, Cout_p).astype(jnp.bfloat16)
    b1p = jnp.zeros((1, Cout_p), jnp.float32).at[:, :Cout].set(b1.reshape(1, Cout))
    w2p = jnp.zeros((K, Cout_p, Cout_p), jnp.float32).at[:, :Cout, :Cout].set(w2)
    w2_cat = w2p.reshape(K * Cout_p, Cout_p).astype(jnp.bfloat16)
    b2p = jnp.zeros((1, Cout_p), jnp.float32).at[:, :Cout].set(b2.reshape(1, Cout))

    has_ds = wd is not None

    TL = _choose_time_tile(L) if time_tile is None else time_tile
    assert L % TL == 0 and (TL % 8 == 0 or TL == L)
    T = L // TL

    args = [x, w1_cat, b1p, w2_cat, b2p]
    in_specs = [
        pl.BlockSpec((1, TL, Cin_p), lambda b, t: (b, t, 0)),
        pl.BlockSpec((K * Cin_p, Cout_p), lambda b, t: (0, 0)),
        pl.BlockSpec((1, Cout_p), lambda b, t: (0, 0)),
        pl.BlockSpec((K * Cout_p, Cout_p), lambda b, t: (0, 0)),
        pl.BlockSpec((1, Cout_p), lambda b, t: (0, 0)),
    ]
    if has_ds:
        wdp = jnp.zeros((Cin_p, Cout_p), jnp.float32).at[:Cin, :Cout].set(wd)
        bdp = jnp.zeros((1, Cout_p), jnp.float32).at[:, :Cout].set(bd.reshape(1, Cout))
        args += [wdp.astype(jnp.bfloat16), bdp]
        in_specs += [
            pl.BlockSpec((Cin_p, Cout_p), lambda b, t: (0, 0)),
            pl.BlockSpec((1, Cout_p), lambda b, t: (0, 0)),
        ]

    kern = functools.partial(temporal_block_kernel, K=K, dilation=dilation,
                             has_downsample=has_ds)
    return pl.pallas_call(
        kern,
        out_shape=jax.ShapeDtypeStruct((N, L, Cout_p), jnp.float32),
        grid=(N, T),
        in_specs=in_specs,
        out_specs=pl.BlockSpec((1, TL, Cout_p), lambda b, t: (b, t, 0)),
        scratch_shapes=[
            pltpu.VMEM((max(pad, 1), Cin_p), jnp.bfloat16),   # x causal-halo carry
            pltpu.VMEM((max(pad, 1), Cout_p), jnp.bfloat16),  # h causal-halo carry
        ],
        compiler_params=pltpu.CompilerParams(
            dimension_semantics=("parallel", "arbitrary"),
            vmem_limit_bytes=64 * 1024 * 1024,
        ),
    )(*args)


def init_tcn_params(key, num_inputs, num_channels, kernel_size):
    """Deterministic N(0, 0.01) weights (matches init_weights std); small biases."""
    params = []
    cin = num_inputs
    for cout in num_channels:
        key, *ks = jax.random.split(key, 7)
        w1 = 0.01 * jax.random.normal(ks[0], (kernel_size, cin, cout), jnp.float32)
        b1 = 0.01 * jax.random.normal(ks[1], (cout,), jnp.float32)
        w2 = 0.01 * jax.random.normal(ks[2], (kernel_size, cout, cout), jnp.float32)
        b2 = 0.01 * jax.random.normal(ks[3], (cout,), jnp.float32)
        if cin != cout:
            wd = 0.01 * jax.random.normal(ks[4], (cin, cout), jnp.float32)
            bd = 0.01 * jax.random.normal(ks[5], (cout,), jnp.float32)
        else:
            wd, bd = None, None
        params.append((w1, b1, w2, b2, wd, bd))
        cin = cout
    return params


def tcn_forward(x_ncl, params, kernel_size, time_tile=None):
    """x_ncl: (N, C, L) like PyTorch -> (N, C_last, L)."""
    N, C, L = x_ncl.shape
    x = jnp.transpose(x_ncl, (0, 2, 1)).astype(jnp.float32)    # -> (N, L, C)
    Cp = _round_up(C, LANE)
    x = jnp.pad(x, ((0, 0), (0, 0), (0, Cp - C)))              # lane-pad channels
    # TODO(synk): cross-layer fusion (keeping activations resident in VMEM
    # across TemporalBlocks) is not implemented; each block is one pallas_call.
    for i, (w1, b1, w2, b2, wd, bd) in enumerate(params):
        x = temporal_block(x, w1, b1, w2, b2, wd, bd,
                           K=kernel_size, dilation=2 ** i, time_tile=time_tile)
    C_last = params[-1][0].shape[2]
    return jnp.transpose(x[:, :, :C_last], (0, 2, 1))          # -> (N, C, L)


# ---------------- pure-JAX f32 reference (for correctness check) ----------------
def _ref_causal_conv(x, w, b, K, d):
    N, L, _ = x.shape
    pad = (K - 1) * d
    xp = jnp.pad(x, ((0, 0), (pad, 0), (0, 0)))
    y = jnp.zeros((N, L, w.shape[2]), jnp.float32)
    for k in range(K):
        y = y + jnp.einsum('nlc,cd->nld', xp[:, k * d:k * d + L, :], w[k])
    return y + b


def tcn_ref(x_ncl, params, kernel_size):
    x = jnp.transpose(x_ncl, (0, 2, 1)).astype(jnp.float32)
    for i, (w1, b1, w2, b2, wd, bd) in enumerate(params):
        d = 2 ** i
        h = jax.nn.relu(_ref_causal_conv(x, w1, b1, kernel_size, d))
        out = jax.nn.relu(_ref_causal_conv(h, w2, b2, kernel_size, d))
        res = x if wd is None else jnp.einsum('nlc,cd->nld', x, wd) + bd
        x = jax.nn.relu(out + res)
    return jnp.transpose(x, (0, 2, 1))


if __name__ == "__main__":
    key = jax.random.PRNGKey(0)
    k_x, k_p = jax.random.split(key)

    # Small shapes: batch=2, num_inputs=4, seq length=16, channels=[8, 8]
    # (first block exercises the 1x1 downsample path, second the identity path)
    N, C_in, L = 2, 4, 16
    num_channels = [8, 8]
    kernel_size = 2

    x = jax.random.normal(k_x, (N, C_in, L), jnp.float32)      # PyTorch NCL layout
    params = init_tcn_params(k_p, C_in, num_channels, kernel_size)

    # time_tile=8 -> two time tiles per sequence, exercising the causal-carry path.
    fwd = jax.jit(functools.partial(tcn_forward, kernel_size=kernel_size,
                                    time_tile=8))
    y = fwd(x, params)
    y = jax.block_until_ready(y)

    y_ref = tcn_ref(x, params, kernel_size)
    assert y.shape == (N, num_channels[-1], L)
    # bf16 MXU inputs with f32 accumulation -> bf16-appropriate tolerance.
    err = float(jnp.max(jnp.abs(y - y_ref)))
    assert jnp.allclose(y, y_ref, atol=1e-2, rtol=1e-2), err

    print("KERNEL_OK")
</pallas_src>

<mosaic_0001>
module attributes {stable_mosaic.version = 11 : i64} {
  func.func @temporal_block_kernel(%arg0: i32, %arg1: i32, %arg2: memref<1x8x128xf32, #tpu.memory_space<vmem>>, %arg3: memref<256x128xbf16, #tpu.memory_space<vmem>>, %arg4: memref<1x128xf32, #tpu.memory_space<vmem>>, %arg5: memref<256x128xbf16, #tpu.memory_space<vmem>>, %arg6: memref<1x128xf32, #tpu.memory_space<vmem>>, %arg7: memref<1x8x128xf32, #tpu.memory_space<vmem>>, %arg8: memref<2x128xbf16, #tpu.memory_space<vmem>>, %arg9: memref<2x128xbf16, #tpu.memory_space<vmem>>) attributes {dimension_semantics = [#tpu.dimension_semantics<parallel>, #tpu.dimension_semantics<arbitrary>], iteration_bounds = array<i64: 2, 2>, scalar_prefetch = 0 : i64, scratch_operands = 2 : i64, tpu.core_type = #tpu.core_type<tc>, window_params = [{transform_indices = @transform_0, window_bounds = array<i64: 1, 8, 128>}, {pipeline_mode = #tpu.pipeline_mode<synchronous>, transform_indices = @transform_1, window_bounds = array<i64: 256, 128>}, {pipeline_mode = #tpu.pipeline_mode<synchronous>, transform_indices = @transform_2, window_bounds = array<i64: 1, 128>}, {pipeline_mode = #tpu.pipeline_mode<synchronous>, transform_indices = @transform_3, window_bounds = array<i64: 256, 128>}, {pipeline_mode = #tpu.pipeline_mode<synchronous>, transform_indices = @transform_4, window_bounds = array<i64: 1, 128>}, {transform_indices = @transform_5, window_bounds = array<i64: 1, 8, 128>}]} {
    %c0 = arith.constant 0 : index
    %c0_0 = arith.constant 0 : index
    %c0_1 = arith.constant 0 : index
    %0 = vector.load %arg2[%c0, %c0_0, %c0_1] : memref<1x8x128xf32, #tpu.memory_space<vmem>>, vector<1x8x128xf32>
    %1 = vector.shape_cast %0 : vector<1x8x128xf32> to vector<8x128xf32>
    %2 = arith.truncf %1 : vector<8x128xf32> to vector<8x128xbf16>
    %c0_i32 = arith.constant 0 : i32
    %3 = arith.cmpi eq, %arg1, %c0_i32 : i32
    %4 = arith.extui %3 : i1 to i32
    %c0_i32_2 = arith.constant 0 : i32
    %5 = arith.cmpi ne, %4, %c0_i32_2 : i32
    scf.if %5 {
      %cst_26 = arith.constant 0.000000e+00 : bf16
      %41 = vector.broadcast %cst_26 : bf16 to vector<2x128xbf16>
      %c0_27 = arith.constant 0 : index
      %c0_28 = arith.constant 0 : index
      %42 = vector.load %arg8[%c0_27, %c0_28] : memref<2x128xbf16, #tpu.memory_space<vmem>>, vector<2x128xbf16>
      tpu.vector_store %arg8[%c0_27, %c0_28], %41 {strides = array<i32>} : memref<2x128xbf16, #tpu.memory_space<vmem>>, vector<2x128xbf16>,
      %cst_29 = arith.constant 0.000000e+00 : bf16
      %43 = vector.broadcast %cst_29 : bf16 to vector<2x128xbf16>
      %c0_30 = arith.constant 0 : index
      %c0_31 = arith.constant 0 : index
      %44 = vector.load %arg9[%c0_30, %c0_31] : memref<2x128xbf16, #tpu.memory_space<vmem>>, vector<2x128xbf16>
      tpu.vector_store %arg9[%c0_30, %c0_31], %43 {strides = array<i32>} : memref<2x128xbf16, #tpu.memory_space<vmem>>, vector<2x128xbf16>,
    } else {
    }
    %c0_3 = arith.constant 0 : index
    %c0_4 = arith.constant 0 : index
    %6 = vector.load %arg8[%c0_3, %c0_4] : memref<2x128xbf16, #tpu.memory_space<vmem>>, vector<2x128xbf16>
    %7 = tpu.concatenate %6, %2 in 0 : vector<2x128xbf16>, vector<8x128xbf16> -> vector<10x128xbf16>
    %8 = vector.extract_strided_slice %7 {offsets = [0, 0], sizes = [8, 128], strides = [1, 1]} : vector<10x128xbf16> to vector<8x128xbf16>
    %9 = vector.extract_strided_slice %7 {offsets = [2, 0], sizes = [8, 128], strides = [1, 1]} : vector<10x128xbf16> to vector<8x128xbf16>
    %10 = tpu.concatenate %8, %9 in 1 : vector<8x128xbf16>, vector<8x128xbf16> -> vector<8x256xbf16>
    %c0_5 = arith.constant 0 : index
    %c0_6 = arith.constant 0 : index
    %11 = vector.load %arg3[%c0_5, %c0_6] : memref<256x128xbf16, #tpu.memory_space<vmem>>, vector<256x128xbf16>
    %cst = arith.constant dense<0.000000e+00> : vector<8x128xf32>
    %12 = tpu.matmul %10, %11, %cst {dimension_numbers = #tpu.dot_dimension_numbers<[1], [0], [0], [1], [0, 0, 1, 1], [], []>} : vector<8x256xbf16>, vector<256x128xbf16>, vector<8x128xf32> -> vector<8x128xf32>
    %c0_7 = arith.constant 0 : index
    %c0_8 = arith.constant 0 : index
    %13 = vector.load %arg4[%c0_7, %c0_8] : memref<1x128xf32, #tpu.memory_space<vmem>>, vector<1x128xf32>
    %14 = vector.broadcast %13 : vector<1x128xf32> to vector<8x128xf32>
    %15 = arith.addf %12, %14 : vector<8x128xf32>
    %cst_9 = arith.constant 0.000000e+00 : f32
    %16 = vector.broadcast %cst_9 : f32 to vector<8x128xf32>
    %17 = arith.maximumf %15, %16 : vector<8x128xf32>
    %18 = arith.truncf %17 : vector<8x128xf32> to vector<8x128xbf16>
    %c0_10 = arith.constant 0 : index
    %c0_11 = arith.constant 0 : index
    %19 = vector.load %arg9[%c0_10, %c0_11] : memref<2x128xbf16, #tpu.memory_space<vmem>>, vector<2x128xbf16>
    %20 = tpu.concatenate %19, %18 in 0 : vector<2x128xbf16>, vector<8x128xbf16> -> vector<10x128xbf16>
    %21 = vector.extract_strided_slice %7 {offsets = [8, 0], sizes = [2, 128], strides = [1, 1]} : vector<10x128xbf16> to vector<2x128xbf16>
    %c0_12 = arith.constant 0 : index
    %c0_13 = arith.constant 0 : index
    %22 = vector.load %arg8[%c0_12, %c0_13] : memref<2x128xbf16, #tpu.memory_space<vmem>>, vector<2x128xbf16>
    tpu.vector_store %arg8[%c0_12, %c0_13], %21 {strides = array<i32>} : memref<2x128xbf16, #tpu.memory_space<vmem>>, vector<2x128xbf16>,
    %23 = vector.extract_strided_slice %20 {offsets = [8, 0], sizes = [2, 128], strides = [1, 1]} : vector<10x128xbf16> to vector<2x128xbf16>
    %c0_14 = arith.constant 0 : index
    %c0_15 = arith.constant 0 : index
    %24 = vector.load %arg9[%c0_14, %c0_15] : memref<2x128xbf16, #tpu.memory_space<vmem>>, vector<2x128xbf16>
    tpu.vector_store %arg9[%c0_14, %c0_15], %23 {strides = array<i32>} : memref<2x128xbf16, #tpu.memory_space<vmem>>, vector<2x128xbf16>,
    %25 = vector.extract_strided_slice %20 {offsets = [0, 0], sizes = [8, 128], strides = [1, 1]} : vector<10x128xbf16> to vector<8x128xbf16>
    %26 = vector.extract_strided_slice %20 {offsets = [2, 0], sizes = [8, 128], strides = [1, 1]} : vector<10x128xbf16> to vector<8x128xbf16>
    %27 = tpu.concatenate %25, %26 in 1 : vector<8x128xbf16>, vector<8x128xbf16> -> vector<8x256xbf16>
    %c0_16 = arith.constant 0 : index
    %c0_17 = arith.constant 0 : index
    %28 = vector.load %arg5[%c0_16, %c0_17] : memref<256x128xbf16, #tpu.memory_space<vmem>>, vector<256x128xbf16>
    %cst_18 = arith.constant dense<0.000000e+00> : vector<8x128xf32>
    %29 = tpu.matmul %27, %28, %cst_18 {dimension_numbers = #tpu.dot_dimension_numbers<[1], [0], [0], [1], [0, 0, 1, 1], [], []>} : vector<8x256xbf16>, vector<256x128xbf16>, vector<8x128xf32> -> vector<8x128xf32>
    %c0_19 = arith.constant 0 : index
    %c0_20 = arith.constant 0 : index
    %30 = vector.load %arg6[%c0_19, %c0_20] : memref<1x128xf32, #tpu.memory_space<vmem>>, vector<1x128xf32>
    %31 = vector.broadcast %30 : vector<1x128xf32> to vector<8x128xf32>
    %32 = arith.addf %29, %31 : vector<8x128xf32>
    %cst_21 = arith.constant 0.000000e+00 : f32
    %33 = vector.broadcast %cst_21 : f32 to vector<8x128xf32>
    %34 = arith.maximumf %32, %33 : vector<8x128xf32>
    %35 = arith.addf %34, %1 : vector<8x128xf32>
    %cst_22 = arith.constant 0.000000e+00 : f32
    %36 = vector.broadcast %cst_22 : f32 to vector<8x128xf32>
    %37 = arith.maximumf %35, %36 : vector<8x128xf32>
    %c0_23 = arith.constant 0 : index
    %c0_24 = arith.constant 0 : index
    %c0_25 = arith.constant 0 : index
    %38 = vector.load %arg7[%c0_23, %c0_24, %c0_25] : memref<1x8x128xf32, #tpu.memory_space<vmem>>, vector<1x8x128xf32>
    %39 = vector.shape_cast %38 : vector<1x8x128xf32> to vector<8x128xf32>
    %40 = vector.shape_cast %37 : vector<8x128xf32> to vector<1x8x128xf32>
    tpu.vector_store %arg7[%c0_23, %c0_24, %c0_25], %40 {strides = array<i32>} : memref<1x8x128xf32, #tpu.memory_space<vmem>>, vector<1x8x128xf32>,
    return
  }
  func.func @transform_0(%arg0: i32, %arg1: i32) -> (i32, i32, i32) {
    %c0_i32 = arith.constant 0 : i32
    %c0_i32_0 = arith.constant 0 : i32
    return %arg0, %arg1, %c0_i32 : i32, i32, i32
  }
  func.func @transform_1(%arg0: i32, %arg1: i32) -> (i32, i32) {
    %c0_i32 = arith.constant 0 : i32
    %c0_i32_0 = arith.constant 0 : i32
    %c0_i32_1 = arith.constant 0 : i32
    return %c0_i32, %c0_i32_0 : i32, i32
  }
  func.func @transform_2(%arg0: i32, %arg1: i32) -> (i32, i32) {
    %c0_i32 = arith.constant 0 : i32
    %c0_i32_0 = arith.constant 0 : i32
    %c0_i32_1 = arith.constant 0 : i32
    return %c0_i32, %c0_i32_0 : i32, i32
  }
  func.func @transform_3(%arg0: i32, %arg1: i32) -> (i32, i32) {
    %c0_i32 = arith.constant 0 : i32
    %c0_i32_0 = arith.constant 0 : i32
    %c0_i32_1 = arith.constant 0 : i32
    return %c0_i32, %c0_i32_0 : i32, i32
  }
  func.func @transform_4(%arg0: i32, %arg1: i32) -> (i32, i32) {
    %c0_i32 = arith.constant 0 : i32
    %c0_i32_0 = arith.constant 0 : i32
    %c0_i32_1 = arith.constant 0 : i32
    return %c0_i32, %c0_i32_0 : i32, i32
  }
  func.func @transform_5(%arg0: i32, %arg1: i32) -> (i32, i32, i32) {
    %c0_i32 = arith.constant 0 : i32
    %c0_i32_0 = arith.constant 0 : i32
    return %arg0, %arg1, %c0_i32 : i32, i32, i32
  }
}

module attributes {stable_mosaic.version = 11 : i64} {
  func.func @temporal_block_kernel(%arg0: i32, %arg1: i32, %arg2: memref<1x8x128xf32, #tpu.memory_space<vmem>>, %arg3: memref<256x128xbf16, #tpu.memory_space<vmem>>, %arg4: memref<1x128xf32, #tpu.memory_space<vmem>>, %arg5: memref<256x128xbf16, #tpu.memory_space<vmem>>, %arg6: memref<1x128xf32, #tpu.memory_space<vmem>>, %arg7: memref<128x128xbf16, #tpu.memory_space<vmem>>, %arg8: memref<1x128xf32, #tpu.memory_space<vmem>>, %arg9: memref<1x8x128xf32, #tpu.memory_space<vmem>>, %arg10: memref<1x128xbf16, #tpu.memory_space<vmem>>, %arg11: memref<1x128xbf16, #tpu.memory_space<vmem>>) attributes {dimension_semantics = [#tpu.dimension_semantics<parallel>, #tpu.dimension_semantics<arbitrary>], iteration_bounds = array<i64: 2, 2>, scalar_prefetch = 0 : i64, scratch_operands = 2 : i64, tpu.core_type = #tpu.core_type<tc>, window_params = [{transform_indices = @transform_0, window_bounds = array<i64: 1, 8, 128>}, {pipeline_mode = #tpu.pipeline_mode<synchronous>, transform_indices = @transform_1, window_bounds = array<i64: 256, 128>}, {pipeline_mode = #tpu.pipeline_mode<synchronous>, transform_indices = @transform_2, window_bounds = array<i64: 1, 128>}, {pipeline_mode = #tpu.pipeline_mode<synchronous>, transform_indices = @transform_3, window_bounds = array<i64: 256, 128>}, {pipeline_mode = #tpu.pipeline_mode<synchronous>, transform_indices = @transform_4, window_bounds = array<i64: 1, 128>}, {pipeline_mode = #tpu.pipeline_mode<synchronous>, transform_indices = @transform_5, window_bounds = array<i64: 128, 128>}, {pipeline_mode = #tpu.pipeline_mode<synchronous>, transform_indices = @transform_6, window_bounds = array<i64: 1, 128>}, {transform_indices = @transform_7, window_bounds = array<i64: 1, 8, 128>}]} {
    %c0 = arith.constant 0 : index
    %c0_0 = arith.constant 0 : index
    %c0_1 = arith.constant 0 : index
    %0 = vector.load %arg2[%c0, %c0_0, %c0_1] : memref<1x8x128xf32, #tpu.memory_space<vmem>>, vector<1x8x128xf32>
    %1 = vector.shape_cast %0 : vector<1x8x128xf32> to vector<8x128xf32>
    %2 = arith.truncf %1 : vector<8x128xf32> to vector<8x128xbf16>
    %c0_i32 = arith.constant 0 : i32
    %3 = arith.cmpi eq, %arg1, %c0_i32 : i32
    %4 = arith.extui %3 : i1 to i32
    %c0_i32_2 = arith.constant 0 : i32
    %5 = arith.cmpi ne, %4, %c0_i32_2 : i32
    scf.if %5 {
      %cst_31 = arith.constant 0.000000e+00 : bf16
      %46 = vector.broadcast %cst_31 : bf16 to vector<1x128xbf16>
      %c0_32 = arith.constant 0 : index
      %c0_33 = arith.constant 0 : index
      %47 = vector.load %arg10[%c0_32, %c0_33] : memref<1x128xbf16, #tpu.memory_space<vmem>>, vector<1x128xbf16>
      tpu.vector_store %arg10[%c0_32, %c0_33], %46 {strides = array<i32>} : memref<1x128xbf16, #tpu.memory_space<vmem>>, vector<1x128xbf16>,
      %cst_34 = arith.constant 0.000000e+00 : bf16
      %48 = vector.broadcast %cst_34 : bf16 to vector<1x128xbf16>
      %c0_35 = arith.constant 0 : index
      %c0_36 = arith.constant 0 : index
      %49 = vector.load %arg11[%c0_35, %c0_36] : memref<1x128xbf16, #tpu.memory_space<vmem>>, vector<1x128xbf16>
      tpu.vector_store %arg11[%c0_35, %c0_36], %48 {strides = array<i32>} : memref<1x128xbf16, #tpu.memory_space<vmem>>, vector<1x128xbf16>,
    } else {
    }
    %c0_3 = arith.constant 0 : index
    %c0_4 = arith.constant 0 : index
    %6 = vector.load %arg10[%c0_3, %c0_4] : memref<1x128xbf16, #tpu.memory_space<vmem>>, vector<1x128xbf16>
    %7 = tpu.concatenate %6, %2 in 0 : vector<1x128xbf16>, vector<8x128xbf16> -> vector<9x128xbf16>
    %8 = vector.extract_strided_slice %7 {offsets = [0, 0], sizes = [8, 128], strides = [1, 1]} : vector<9x128xbf16> to vector<8x128xbf16>
    %9 = vector.extract_strided_slice %7 {offsets = [1, 0], sizes = [8, 128], strides = [1, 1]} : vector<9x128xbf16> to vector<8x128xbf16>
    %10 = tpu.concatenate %8, %9 in 1 : vector<8x128xbf16>, vector<8x128xbf16> -> vector<8x256xbf16>
    %c0_5 = arith.constant 0 : index
    %c0_6 = arith.constant 0 : index
    %11 = vector.load %arg3[%c0_5, %c0_6] : memref<256x128xbf16, #tpu.memory_space<vmem>>, vector<256x128xbf16>
    %cst = arith.constant dense<0.000000e+00> : vector<8x128xf32>
    %12 = tpu.matmul %10, %11, %cst {dimension_numbers = #tpu.dot_dimension_numbers<[1], [0], [0], [1], [0, 0, 1, 1], [], []>} : vector<8x256xbf16>, vector<256x128xbf16>, vector<8x128xf32> -> vector<8x128xf32>
    %c0_7 = arith.constant 0 : index
    %c0_8 = arith.constant 0 : index
    %13 = vector.load %arg4[%c0_7, %c0_8] : memref<1x128xf32, #tpu.memory_space<vmem>>, vector<1x128xf32>
    %14 = vector.broadcast %13 : vector<1x128xf32> to vector<8x128xf32>
    %15 = arith.addf %12, %14 : vector<8x128xf32>
    %cst_9 = arith.constant 0.000000e+00 : f32
    %16 = vector.broadcast %cst_9 : f32 to vector<8x128xf32>
    %17 = arith.maximumf %15, %16 : vector<8x128xf32>
    %18 = arith.truncf %17 : vector<8x128xf32> to vector<8x128xbf16>
    %c0_10 = arith.constant 0 : index
    %c0_11 = arith.constant 0 : index
    %19 = vector.load %arg11[%c0_10, %c0_11] : memref<1x128xbf16, #tpu.memory_space<vmem>>, vector<1x128xbf16>
    %20 = tpu.concatenate %19, %18 in 0 : vector<1x128xbf16>, vector<8x128xbf16> -> vector<9x128xbf16>
    %21 = vector.extract_strided_slice %7 {offsets = [8, 0], sizes = [1, 128], strides = [1, 1]} : vector<9x128xbf16> to vector<1x128xbf16>
    %c0_12 = arith.constant 0 : index
    %c0_13 = arith.constant 0 : index
    %22 = vector.load %arg10[%c0_12, %c0_13] : memref<1x128xbf16, #tpu.memory_space<vmem>>, vector<1x128xbf16>
    tpu.vector_store %arg10[%c0_12, %c0_13], %21 {strides = array<i32>} : memref<1x128xbf16, #tpu.memory_space<vmem>>, vector<1x128xbf16>,
    %23 = vector.extract_strided_slice %20 {offsets = [8, 0], sizes = [1, 128], strides = [1, 1]} : vector<9x128xbf16> to vector<1x128xbf16>
    %c0_14 = arith.constant 0 : index
    %c0_15 = arith.constant 0 : index
    %24 = vector.load %arg11[%c0_14, %c0_15] : memref<1x128xbf16, #tpu.memory_space<vmem>>, vector<1x128xbf16>
    tpu.vector_store %arg11[%c0_14, %c0_15], %23 {strides = array<i32>} : memref<1x128xbf16, #tpu.memory_space<vmem>>, vector<1x128xbf16>,
    %25 = vector.extract_strided_slice %20 {offsets = [0, 0], sizes = [8, 128], strides = [1, 1]} : vector<9x128xbf16> to vector<8x128xbf16>
    %26 = vector.extract_strided_slice %20 {offsets = [1, 0], sizes = [8, 128], strides = [1, 1]} : vector<9x128xbf16> to vector<8x128xbf16>
    %27 = tpu.concatenate %25, %26 in 1 : vector<8x128xbf16>, vector<8x128xbf16> -> vector<8x256xbf16>
    %c0_16 = arith.constant 0 : index
    %c0_17 = arith.constant 0 : index
    %28 = vector.load %arg5[%c0_16, %c0_17] : memref<256x128xbf16, #tpu.memory_space<vmem>>, vector<256x128xbf16>
    %cst_18 = arith.constant dense<0.000000e+00> : vector<8x128xf32>
    %29 = tpu.matmul %27, %28, %cst_18 {dimension_numbers = #tpu.dot_dimension_numbers<[1], [0], [0], [1], [0, 0, 1, 1], [], []>} : vector<8x256xbf16>, vector<256x128xbf16>, vector<8x128xf32> -> vector<8x128xf32>
    %c0_19 = arith.constant 0 : index
    %c0_20 = arith.constant 0 : index
    %30 = vector.load %arg6[%c0_19, %c0_20] : memref<1x128xf32, #tpu.memory_space<vmem>>, vector<1x128xf32>
    %31 = vector.broadcast %30 : vector<1x128xf32> to vector<8x128xf32>
    %32 = arith.addf %29, %31 : vector<8x128xf32>
    %cst_21 = arith.constant 0.000000e+00 : f32
    %33 = vector.broadcast %cst_21 : f32 to vector<8x128xf32>
    %34 = arith.maximumf %32, %33 : vector<8x128xf32>
    %c0_22 = arith.constant 0 : index
    %c0_23 = arith.constant 0 : index
    %35 = vector.load %arg7[%c0_22, %c0_23] : memref<128x128xbf16, #tpu.memory_space<vmem>>, vector<128x128xbf16>
    %cst_24 = arith.constant dense<0.000000e+00> : vector<8x128xf32>
    %36 = tpu.matmul %2, %35, %cst_24 {dimension_numbers = #tpu.dot_dimension_numbers<[1], [0], [0], [1], [0, 0, 1, 1], [], []>} : vector<8x128xbf16>, vector<128x128xbf16>, vector<8x128xf32> -> vector<8x128xf32>
    %c0_25 = arith.constant 0 : index
    %c0_26 = arith.constant 0 : index
    %37 = vector.load %arg8[%c0_25, %c0_26] : memref<1x128xf32, #tpu.memory_space<vmem>>, vector<1x128xf32>
    %38 = vector.broadcast %37 : vector<1x128xf32> to vector<8x128xf32>
    %39 = arith.addf %36, %38 : vector<8x128xf32>
    %40 = arith.addf %34, %39 : vector<8x128xf32>
    %cst_27 = arith.constant 0.000000e+00 : f32
    %41 = vector.broadcast %cst_27 : f32 to vector<8x128xf32>
    %42 = arith.maximumf %40, %41 : vector<8x128xf32>
    %c0_28 = arith.constant 0 : index
    %c0_29 = arith.constant 0 : index
    %c0_30 = arith.constant 0 : index
    %43 = vector.load %arg9[%c0_28, %c0_29, %c0_30] : memref<1x8x128xf32, #tpu.memory_space<vmem>>, vector<1x8x128xf32>
    %44 = vector.shape_cast %43 : vector<1x8x128xf32> to vector<8x128xf32>
    %45 = vector.shape_cast %42 : vector<8x128xf32> to vector<1x8x128xf32>
    tpu.vector_store %arg9[%c0_28, %c0_29, %c0_30], %45 {strides = array<i32>} : memref<1x8x128xf32, #tpu.memory_space<vmem>>, vector<1x8x128xf32>,
    return
  }
  func.func @transform_0(%arg0: i32, %arg1: i32) -> (i32, i32, i32) {
    %c0_i32 = arith.constant 0 : i32
    %c0_i32_0 = arith.constant 0 : i32
    return %arg0, %arg1, %c0_i32 : i32, i32, i32
  }
  func.func @transform_1(%arg0: i32, %arg1: i32) -> (i32, i32) {
    %c0_i32 = arith.constant 0 : i32
    %c0_i32_0 = arith.constant 0 : i32
    %c0_i32_1 = arith.constant 0 : i32
    return %c0_i32, %c0_i32_0 : i32, i32
  }
  func.func @transform_2(%arg0: i32, %arg1: i32) -> (i32, i32) {
    %c0_i32 = arith.constant 0 : i32
    %c0_i32_0 = arith.constant 0 : i32
    %c0_i32_1 = arith.constant 0 : i32
    return %c0_i32, %c0_i32_0 : i32, i32
  }
  func.func @transform_3(%arg0: i32, %arg1: i32) -> (i32, i32) {
    %c0_i32 = arith.constant 0 : i32
    %c0_i32_0 = arith.constant 0 : i32
    %c0_i32_1 = arith.constant 0 : i32
    return %c0_i32, %c0_i32_0 : i32, i32
  }
  func.func @transform_4(%arg0: i32, %arg1: i32) -> (i32, i32) {
    %c0_i32 = arith.constant 0 : i32
    %c0_i32_0 = arith.constant 0 : i32
    %c0_i32_1 = arith.constant 0 : i32
    return %c0_i32, %c0_i32_0 : i32, i32
  }
  func.func @transform_5(%arg0: i32, %arg1: i32) -> (i32, i32) {
    %c0_i32 = arith.constant 0 : i32
    %c0_i32_0 = arith.constant 0 : i32
    %c0_i32_1 = arith.constant 0 : i32
    return %c0_i32, %c0_i32_0 : i32, i32
  }
  func.func @transform_6(%arg0: i32, %arg1: i32) -> (i32, i32) {
    %c0_i32 = arith.constant 0 : i32
    %c0_i32_0 = arith.constant 0 : i32
    %c0_i32_1 = arith.constant 0 : i32
    return %c0_i32, %c0_i32_0 : i32, i32
  }
  func.func @transform_7(%arg0: i32, %arg1: i32) -> (i32, i32, i32) {
    %c0_i32 = arith.constant 0 : i32
    %c0_i32_0 = arith.constant 0 : i32
    return %arg0, %arg1, %c0_i32 : i32, i32, i32
  }
}

</mosaic_0001>

<llo_original>
// kernel: tcn_forward.3
$region0: #{tcn_forward.3}
  #allocation0 [shape = 'u32[]', space=smem, size = 0x4, offset = 0x4, fixed_abs, tag = 'smem constant byte address 0x4 - core index']
  #allocation1 [shape = 'u32[144,128]{1,0:T(1,128)}', space=vmem, size = 0x12000, scoped, tag = 'internal scratch']
  #allocation2 [shape = 'bf16[2,128]{1,0:T(2,128)(2,1)}', space=vmem, size = 0x200, scoped, tag = 'scratch operand']
  #allocation3 [shape = 'bf16[2,128]{1,0:T(2,128)(2,1)}', space=vmem, size = 0x200, scoped, tag = 'scratch operand']
  %s0 = inlined_call_operand.vmem [shape: f32[2,16,128], index: 0, kind: input, shape index: {}]
  %s1 = inlined_call_operand.vmem [shape: bf16[256,128], index: 1, kind: input, shape index: {}]
  %s2 = inlined_call_operand.vmem [shape: f32[1,128], index: 2, kind: input, shape index: {}]
  %s3 = inlined_call_operand.vmem [shape: bf16[256,128], index: 3, kind: input, shape index: {}]
  %s4 = inlined_call_operand.vmem [shape: f32[1,128], index: 4, kind: input, shape index: {}]
  %s5 = inlined_call_operand.vmem [shape: f32[2,16,128], index: 5, kind: output, shape index: {}]
  %s6 = sld [smem:[#allocation0]]
  $region57: #{tcn_forward.3} parent=0
    _
  %s8 = ssub.s32 1, %s6
  %s9 = scalar_select 0, %s8, %s6
  loop: start=0, step=1, limit=6
  $region2: #{tcn_forward.3} parent=0 // loop_pre_header
    _
  $region3: #{tcn_forward.3} parent=0 // loop_header
    %s11 = sphi 0, %s15
    %p12 = scmp.ge.s32.totalorder %s11, 6
    %s18 = sphi 0, %s30
    %s19 = sphi 0, %s26
    %s20 = sphi 0, %s18
    %s21 = sphi 0, %s19
    %s22 = sphi 0, %s20
    %s23 = sphi 0, %s21
    %s35 = sphi 0, %s37
    %s38 = sphi 0, %s35
    %s39 = sphi 0, %s38
    %s55 = sphi 0, %s39
    %s59 = sphi 0, %s59
    %s61 = sphi 0, %s59
    %s62 = sphi 0, %s61
    %s76 = sphi 0, %s62
    %s80 = sphi 0, %s80
    %s82 = sphi 0, %s80
    %s83 = sphi 0, %s82
    %s97 = sphi 0, %s83
    %s101 = sphi 0, %s101
    %s103 = sphi 0, %s101
    %s104 = sphi 0, %s103
    %s118 = sphi 0, %s104
    %s122 = sphi 0, %s122
    %s124 = sphi 0, %s122
    %s125 = sphi 0, %s124
    %s139 = sphi 0, %s125
    %s147 = sphi 0, %s149
    %s150 = sphi 0, %s147
    %s151 = sphi 0, %s150
    %s167 = sphi 0, %s151
  $region4: #{tcn_forward.3} parent=0 // loop_header_branch
    %14 = sbr.rel (%p12) target = $region8
  $region5: #{tcn_forward.3} parent=0 // loop_body
    %s16 = ssub.s32 %s11, 1
    %s17 = ssub.s32 %s11, 2
    %s24 = sadd.s32 1, %s19
    %p25 = scmp.ge.s32.totalorder %s24, 2
    %s26 = scalar_select %p25, 0, %s24
    %s27 = sadd.s32 1, %s18
    %s28 = scalar_select %p25, %s27, %s18
    %p29 = scmp.ge.s32.totalorder %s28, 2
    %s30 = scalar_select %p29, 0, %s28
    %s31 = ssub.s32 %s18, %s30
    %s32 = ssub.s32 %s19, %s26
    %s33 = sor.u32 %s31, %s32
    %p34 = scmp.eq.s32.totalorder %s33, 0
    %s36 = sadd.s32 %s35, 1
    %s37 = scalar_select %p34, %s35, %s36
    %p40 = pneg %p34
    %p41 = scmp.eq.s32.totalorder %s11, 3
    %p42 = por %p40, %p41
    %p43 = scmp.ne.s32.totalorder %s35, %s38
    %p44 = scmp.eq.s32.totalorder %s11, 0
    %p45 = por %p43, %p44
    %p46 = scmp.ne.s32.totalorder %s35, %s38
    %p47 = scmp.eq.s32.totalorder %s16, 3
    %p48 = por %p46, %p47
    %p49 = scmp.ne.s32.totalorder %s38, %s39
    %p50 = scmp.eq.s32.totalorder %s16, 0
    %p51 = por %p49, %p50
    %p52 = scmp.ne.s32.totalorder %s38, %s39
    %p53 = scmp.eq.s32.totalorder %s17, 3
    %p54 = por %p52, %p53
    %p56 = scmp.ne.s32.totalorder %s39, %s55
    %p57 = scmp.eq.s32.totalorder %s17, 0
    %p58 = por %p56, %p57
    %s60 = sadd.s32 %s59, 1
    %p63 = scmp.eq.s32.totalorder %s11, 3
    %p64 = scmp.ne.s32.totalorder %s59, %s61
    %p65 = scmp.eq.s32.totalorder %s11, 0
    %p66 = por %p64, %p65
    %p67 = scmp.ne.s32.totalorder %s59, %s61
    %p68 = scmp.eq.s32.totalorder %s16, 3
    %p69 = por %p67, %p68
    %p70 = scmp.ne.s32.totalorder %s61, %s62
    %p71 = scmp.eq.s32.totalorder %s16, 0
    %p72 = por %p70, %p71
    %p73 = scmp.ne.s32.totalorder %s61, %s62
    %p74 = scmp.eq.s32.totalorder %s17, 3
    %p75 = por %p73, %p74
    %p77 = scmp.ne.s32.totalorder %s62, %s76
    %p78 = scmp.eq.s32.totalorder %s17, 0
    %p79 = por %p77, %p78
    %s81 = sadd.s32 %s80, 1
    %p84 = scmp.eq.s32.totalorder %s11, 3
    %p85 = scmp.ne.s32.totalorder %s80, %s82
    %p86 = scmp.eq.s32.totalorder %s11, 0
    %p87 = por %p85, %p86
    %p88 = scmp.ne.s32.totalorder %s80, %s82
    %p89 = scmp.eq.s32.totalorder %s16, 3
    %p90 = por %p88, %p89
    %p91 = scmp.ne.s32.totalorder %s82, %s83
    %p92 = scmp.eq.s32.totalorder %s16, 0
    %p93 = por %p91, %p92
    %p94 = scmp.ne.s32.totalorder %s82, %s83
    %p95 = scmp.eq.s32.totalorder %s17, 3
    %p96 = por %p94, %p95
    %p98 = scmp.ne.s32.totalorder %s83, %s97
    %p99 = scmp.eq.s32.totalorder %s17, 0
    %p100 = por %p98, %p99
    %s102 = sadd.s32 %s101, 1
    %p105 = scmp.eq.s32.totalorder %s11, 3
    %p106 = scmp.ne.s32.totalorder %s101, %s103
    %p107 = scmp.eq.s32.totalorder %s11, 0
    %p108 = por %p106, %p107
    %p109 = scmp.ne.s32.totalorder %s101, %s103
    %p110 = scmp.eq.s32.totalorder %s16, 3
    %p111 = por %p109, %p110
    %p112 = scmp.ne.s32.totalorder %s103, %s104
    %p113 = scmp.eq.s32.totalorder %s16, 0
    %p114 = por %p112, %p113
    %p115 = scmp.ne.s32.totalorder %s103, %s104
    %p116 = scmp.eq.s32.totalorder %s17, 3
    %p117 = por %p115, %p116
    %p119 = scmp.ne.s32.totalorder %s104, %s118
    %p120 = scmp.eq.s32.totalorder %s17, 0
    %p121 = por %p119, %p120
    %s123 = sadd.s32 %s122, 1
    %p126 = scmp.eq.s32.totalorder %s11, 3
    %p127 = scmp.ne.s32.totalorder %s122, %s124
    %p128 = scmp.eq.s32.totalorder %s11, 0
    %p129 = por %p127, %p128
    %p130 = scmp.ne.s32.totalorder %s122, %s124
    %p131 = scmp.eq.s32.totalorder %s16, 3
    %p132 = por %p130, %p131
    %p133 = scmp.ne.s32.totalorder %s124, %s125
    %p134 = scmp.eq.s32.totalorder %s16, 0
    %p135 = por %p133, %p134
    %p136 = scmp.ne.s32.totalorder %s124, %s125
    %p137 = scmp.eq.s32.totalorder %s17, 3
    %p138 = por %p136, %p137
    %p140 = scmp.ne.s32.totalorder %s125, %s139
    %p141 = scmp.eq.s32.totalorder %s17, 0
    %p142 = por %p140, %p141
    %s143 = ssub.s32 %s18, %s30
    %s144 = ssub.s32 %s19, %s26
    %s145 = sor.u32 %s143, %s144
    %p146 = scmp.eq.s32.totalorder %s145, 0
    %s148 = sadd.s32 %s147, 1
    %s149 = scalar_select %p146, %s147, %s148
    %p152 = pneg %p146
    %p153 = scmp.eq.s32.totalorder %s11, 3
    %p154 = por %p152, %p153
    %p155 = scmp.ne.s32.totalorder %s147, %s150
    %p156 = scmp.eq.s32.totalorder %s11, 0
    %p157 = por %p155, %p156
    %p158 = scmp.ne.s32.totalorder %s147, %s150
    %p159 = scmp.eq.s32.totalorder %s16, 3
    %p160 = por %p158, %p159
    %p161 = scmp.ne.s32.totalorder %s150, %s151
    %p162 = scmp.eq.s32.totalorder %s16, 0
    %p163 = por %p161, %p162
    %p164 = scmp.ne.s32.totalorder %s150, %s151
    %p165 = scmp.eq.s32.totalorder %s17, 3
    %p166 = por %p164, %p165
    %p168 = scmp.ne.s32.totalorder %s151, %s167
    %p169 = scmp.eq.s32.totalorder %s17, 0
    %p170 = por %p168, %p169
    %p171 = scmp.le.s32.totalorder 1, %s11
    %p172 = scmp.lt.s32.totalorder %s11, 5
    %p173 = pnand %p171, %p172
    %p174 = pneg %p173
    // Predicated region
    $region9: #{tcn_forward.3} parent=5 // pred_check
      _
    $region10: #{tcn_forward.3} parent=5 // pred_check_branch
      %176 = sbr.rel (%p173) target = $region12
    $region11: #{tcn_forward.3} parent=5 // pred_region
      %s177 = ssub.s32 %s11, 1
      // Predicated region
      $region13: #{tcn_forward.3} parent=11 // pred_check
        %p178 = pneg %p72
      $region14: #{tcn_forward.3} parent=11 // pred_check_branch
        %180 = sbr.rel (%p178) target = $region16
      $region15: #{tcn_forward.3} parent=11 // pred_region
        _
      $region16: #{tcn_forward.3} parent=11 // pred_fallthru
        _
      // Predicated region
      $region17: #{tcn_forward.3} parent=11 // pred_check
        %p181 = pneg %p93
      $region18: #{tcn_forward.3} parent=11 // pred_check_branch
        %183 = sbr.rel (%p181) target = $region20
      $region19: #{tcn_forward.3} parent=11 // pred_region
        _
      $region20: #{tcn_forward.3} parent=11 // pred_fallthru
        _
      // Predicated region
      $region21: #{tcn_forward.3} parent=11 // pred_check
        %p184 = pneg %p114
      $region22: #{tcn_forward.3} parent=11 // pred_check_branch
        %186 = sbr.rel (%p184) target = $region24
      $region23: #{tcn_forward.3} parent=11 // pred_region
        _
      $region24: #{tcn_forward.3} parent=11 // pred_fallthru
        _
      // Predicated region
      $region25: #{tcn_forward.3} parent=11 // pred_check
        %p187 = pneg %p135
      $region26: #{tcn_forward.3} parent=11 // pred_check_branch
        %189 = sbr.rel (%p187) target = $region28
      $region27: #{tcn_forward.3} parent=11 // pred_region
        _
      $region28: #{tcn_forward.3} parent=11 // pred_fallthru
        _
    $region12: #{tcn_forward.3} parent=5 // pred_fallthru
      _
    %p190 = scmp.lt.s32.totalorder %s11, 4
    // Predicated region
    $region29: #{tcn_forward.3} parent=5 // pred_check
      %p191 = pneg %p190
    $region30: #{tcn_forward.3} parent=5 // pred_check_branch
      %193 = sbr.rel (%p191) target = $region32
    $region31: #{tcn_forward.3} parent=5 // pred_region
      // Predicated region
      $region33: #{tcn_forward.3} parent=31 // pred_check
        %p194 = pneg %p45
      $region34: #{tcn_forward.3} parent=31 // pred_check_branch
        %196 = sbr.rel (%p194) target = $region36
      $region35: #{tcn_forward.3} parent=31 // pred_region
        %p197 = scmp.lt.s32.totalorder %s18, 1
        %s198 = scalar_select %p197, %s18, 1
        %p199 = scmp.lt.s32.totalorder %s19, 1
        %s200 = scalar_select %p199, %s19, 1
        %s201 = smul.addr %s198, 2
        %s202 = sadd.s32 %s200, %s201
        %s203 = smul.addr %s202, 8
        %s204 = scalar_lea.vmem %s0, %s203
      $region36: #{tcn_forward.3} parent=31 // pred_fallthru
        _
    $region32: #{tcn_forward.3} parent=5 // pred_fallthru
      _
    %p205 = scmp.le.s32.totalorder 1, %s11
    %p206 = scmp.lt.s32.totalorder %s11, 5
    %p207 = pnand %p205, %p206
    %p208 = pneg %p207
    // Predicated region
    $region37: #{tcn_forward.3} parent=5 // pred_check
      _
    $region38: #{tcn_forward.3} parent=5 // pred_check_branch
      %210 = sbr.rel (%p207) target = $region40
    $region39: #{tcn_forward.3} parent=5 // pred_region
      %s211 = ssub.s32 %s11, 1
      %p212 = scmp.lt.s32.totalorder %s20, 1
      %s213 = scalar_select %p212, %s20, 1
      %p214 = scmp.lt.s32.totalorder %s21, 1
      %s215 = scalar_select %p214, %s21, 1
      %s216 = smul.addr %s213, 2
      %s217 = sadd.s32 %s215, %s216
      %s218 = smul.addr %s217, 8
      %s219 = scalar_lea.vmem %s0, %s218
      %p220 = pneg %p51
      %p221 = pneg %p48
      %p222 = pneg %p72
      %p223 = pneg %p69
      %p224 = pneg %p93
      %p225 = pneg %p90
      %p226 = pneg %p114
      %p227 = pneg %p111
      %p228 = pneg %p135
      %p229 = pneg %p132
      %p230 = pneg %p163
      %p231 = pneg %p160
      %p232 = scmp.lt.s32.totalorder %s20, 1
      %s233 = scalar_select %p232, %s20, 1
      %p234 = scmp.lt.s32.totalorder %s21, 1
      %s235 = scalar_select %p234, %s21, 1
      %s236 = smul.addr %s233, 2
      %s237 = sadd.s32 %s235, %s236
      %s238 = smul.addr %s237, 8
      %s239 = scalar_lea.vmem %s5, %s238
      %p240 = scmp.lt.s32.totalorder %s20, 1
      %s241 = scalar_select %p240, %s20, 1
      %p242 = scmp.lt.s32.totalorder %s21, 1
      %s243 = scalar_select %p242, %s21, 1
      %s244 = smul.addr %s241, 2
      %s245 = sadd.s32 %s243, %s244
      %s246 = smul.addr %s245, 8
      %s247 = scalar_lea.vmem %s0, %s246
      %p248 = scmp.lt.s32.totalorder %s20, 1
      %s249 = scalar_select %p248, %s20, 1
      %p250 = scmp.lt.s32.totalorder %s21, 1
      %s251 = scalar_select %p250, %s21, 1
      %s252 = smul.addr %s249, 2
      %s253 = sadd.s32 %s251, %s252
      %s254 = smul.addr %s253, 8
      %s255 = scalar_lea.vmem %s5, %s254
      %v257 = vld [vmem:[%s247] sm:$0xff]
      %v258 = vpack.c.bf16 %v257, %v257
      %p259 = scmp.eq.s32.totalorder %s21, 0
      // Predicated region
      $region41: #{tcn_forward.3} parent=39 // pred_check
        %p260 = pneg %p259
      $region42: #{tcn_forward.3} parent=39 // pred_check_branch
        %262 = sbr.rel (%p260) target = $region44
      $region43: #{tcn_forward.3} parent=39 // pred_region
        %263 = vst [vmem:[#allocation2] sm:$0x1] 0
        %264 = vst [vmem:[#allocation3] sm:$0x1] 0
      $region44: #{tcn_forward.3} parent=39 // pred_fallthru
        _
      %v265 = vld [vmem:[#allocation2] sm:$0x1]
      %v267 = vrot.slane %v258, 7
      %vm268 = vcmask 1040384
      %v271 = vsel %vm268, %v265, %v267
      %v274 = vrot.slane %v271, 1
      %v276 = vld [vmem:[%s1] sm:$0xf]
      %v277 = vld [vmem:[%s1 + $0x4] sm:$0xf]
      %v278 = vld [vmem:[%s1 + $0x8] sm:$0xf]
      %v279 = vld [vmem:[%s1 + $0xc] sm:$0xf]
      %v280 = vld [vmem:[%s1 + $0x10] sm:$0xf]
      %v281 = vld [vmem:[%s1 + $0x14] sm:$0xf]
      %v282 = vld [vmem:[%s1 + $0x18] sm:$0xf]
      %v283 = vld [vmem:[%s1 + $0x1c] sm:$0xf]
      %v284 = vld [vmem:[%s1 + $0x20] sm:$0xf]
      %v285 = vld [vmem:[%s1 + $0x24] sm:$0xf]
      %v286 = vld [vmem:[%s1 + $0x28] sm:$0xf]
      %v287 = vld [vmem:[%s1 + $0x2c] sm:$0xf]
      %v288 = vld [vmem:[%s1 + $0x30] sm:$0xf]
      %v289 = vld [vmem:[%s1 + $0x34] sm:$0xf]
      %v290 = vld [vmem:[%s1 + $0x38] sm:$0xf]
      %v291 = vld [vmem:[%s1 + $0x3c] sm:$0xf]
      %v292 = vld [vmem:[%s1 + $0x40] sm:$0xf]
      %v293 = vld [vmem:[%s1 + $0x44] sm:$0xf]
      %v294 = vld [vmem:[%s1 + $0x48] sm:$0xf]
      %v295 = vld [vmem:[%s1 + $0x4c] sm:$0xf]
      %v296 = vld [vmem:[%s1 + $0x50] sm:$0xf]
      %v297 = vld [vmem:[%s1 + $0x54] sm:$0xf]
      %v298 = vld [vmem:[%s1 + $0x58] sm:$0xf]
      %v299 = vld [vmem:[%s1 + $0x5c] sm:$0xf]
      %v300 = vld [vmem:[%s1 + $0x60] sm:$0xf]
      %v301 = vld [vmem:[%s1 + $0x64] sm:$0xf]
      %v302 = vld [vmem:[%s1 + $0x68] sm:$0xf]
      %v303 = vld [vmem:[%s1 + $0x6c] sm:$0xf]
      %v304 = vld [vmem:[%s1 + $0x70] sm:$0xf]
      %v305 = vld [vmem:[%s1 + $0x74] sm:$0xf]
      %v306 = vld [vmem:[%s1 + $0x78] sm:$0xf]
      %v307 = vld [vmem:[%s1 + $0x7c] sm:$0xf]
      %v308 = vld [vmem:[%s2] sm:$0x1]
      %v310 = vlaneseq
      %v311 = vshrl.u32 %v310, 7
      %v312 = vsub.s32 0, %v311
      %v313 = vrot.slane %v308, %v312
      %v347 = vunpack.c.l.b16 %v276
      %v348 = vunpack.c.l.b16 %v277
      %v349 = vunpack.c.l.b16 %v278
      %v350 = vunpack.c.l.b16 %v279
      %v351 = vunpack.c.l.b16 %v280
      %v352 = vunpack.c.l.b16 %v281
      %v353 = vunpack.c.l.b16 %v282
      %v354 = vunpack.c.l.b16 %v283
      %v355 = vunpack.c.l.b16 %v284
      %v356 = vunpack.c.l.b16 %v285
      %v357 = vunpack.c.l.b16 %v286
      %v358 = vunpack.c.l.b16 %v287
      %v359 = vunpack.c.l.b16 %v288
      %v360 = vunpack.c.l.b16 %v289
      %v361 = vunpack.c.l.b16 %v290
      %v362 = vunpack.c.l.b16 %v291
      %v363 = vunpack.c.l.b16 %v292
      %v364 = vunpack.c.l.b16 %v293
      %v365 = vunpack.c.l.b16 %v294
      %v366 = vunpack.c.l.b16 %v295
      %v367 = vunpack.c.l.b16 %v296
      %v368 = vunpack.c.l.b16 %v297
      %v369 = vunpack.c.l.b16 %v298
      %v370 = vunpack.c.l.b16 %v299
      %v371 = vunpack.c.l.b16 %v300
      %v372 = vunpack.c.l.b16 %v301
      %v373 = vunpack.c.l.b16 %v302
      %v374 = vunpack.c.l.b16 %v303
      %v375 = vunpack.c.l.b16 %v304
      %v376 = vunpack.c.l.b16 %v305
      %v377 = vunpack.c.l.b16 %v306
      %v378 = vunpack.c.l.b16 %v307
      %v379 = vpack.c.b16 %v348, %v347
      %v380 = vpack.c.b16 %v350, %v349
      %v381 = vpack.c.b16 %v352, %v351
      %v382 = vpack.c.b16 %v354, %v353
      %v383 = vpack.c.b16 %v356, %v355
      %v384 = vpack.c.b16 %v358, %v357
      %v385 = vpack.c.b16 %v360, %v359
      %v386 = vpack.c.b16 %v362, %v361
      %v387 = vpack.c.b16 %v364, %v363
      %v388 = vpack.c.b16 %v366, %v365
      %v389 = vpack.c.b16 %v368, %v367
      %v390 = vpack.c.b16 %v370, %v369
      %v391 = vpack.c.b16 %v372, %v371
      %v392 = vpack.c.b16 %v374, %v373
      %v393 = vpack.c.b16 %v376, %v375
      %v394 = vpack.c.b16 %v378, %v377
      %411 = vmatprep.subr.bf16.mxu0 0
      %412 = vmatpush1.bf16.msra.mxu0 %v386
      %413 = vmatprep.subr.bf16.mxu0 0
      %414 = vmatpush1.bf16.msra.mxu0 %v385
      %415 = vmatprep.subr.bf16.mxu0 0
      %416 = vmatpush1.bf16.msra.mxu0 %v384
      %417 = vmatprep.subr.bf16.mxu0 0
      %418 = vmatpush1.bf16.msra.mxu0 %v383
      %419 = vmatprep.subr.bf16.mxu0 0
      %420 = vmatpush1.bf16.msra.mxu0 %v382
      %421 = vmatprep.subr.bf16.mxu0 0
      %422 = vmatpush1.bf16.msra.mxu0 %v381
      %423 = vmatprep.subr.bf16.mxu0 0
      %424 = vmatpush1.bf16.msra.mxu0 %v380
      %425 = vmatprep.subr.bf16.mxu0 0
      %426 = vmatpush1.bf16.msra.mxu0 %v379
      %427 = vmatprep.subr.bf16.mxu0 0
      %428 = vmatpush2.bf16.msra.mxu0 %v394
      %429 = vmatprep.subr.bf16.mxu0 0
      %430 = vmatpush2.bf16.msra.mxu0 %v393
      %431 = vmatprep.subr.bf16.mxu0 0
      %432 = vmatpush2.bf16.msra.mxu0 %v392
      %433 = vmatprep.subr.bf16.mxu0 0
      %434 = vmatpush2.bf16.msra.mxu0 %v391
      %435 = vmatprep.subr.bf16.mxu0 0
      %436 = vmatpush2.bf16.msra.mxu0 %v390
      %437 = vmatprep.subr.bf16.mxu0 0
      %438 = vmatpush2.bf16.msra.mxu0 %v389
      %439 = vmatprep.subr.bf16.mxu0 0
      %440 = vmatpush2.bf16.msra.mxu0 %v388
      %441 = vmatprep.subr.bf16.mxu0 0
      %442 = vmatpush2.bf16.msra.mxu0 %v387
      %443 = vmatprep.mubr.bf16.mxu0 %v274
      %444 = vmatmul.mubr.bf16.gmra.mxu0 %v271
      %v445 = vpop.f32.mrf.mxu0
      %v446 = vadd.f32 %v313, %v445
      %v447 = vpop.f32.mrf.mxu0
      %v448 = vpop.f32.mrf.mxu0
      %v449 = vpop.f32.mrf.mxu0
      %450 = vdwg.mxu0
      %v451 = vmax.f32 %v446, 0.0
      %v452 = vpack.c.bf16 %v451, %v451
      %v453 = vld [vmem:[#allocation3] sm:$0x1]
      %v455 = vrot.slane %v452, 7
      %v458 = vsel %vm268, %v453, %v455
      %v460 = vcombine.high %v271, %v271
      %v462 = vunpack.c.l.s4 1966171168
      %v463 = vunpack.c.0.s8 %v462
      %v464 = vlaneseq
      %v465 = vshrl.u32 %v464, 7
      %v466 = vsub.s32 %v463, %v465
      %v467 = vrot.slane %v460, %v466
      %v469 = vunpack.c.l.s4 1966171168
      %v470 = vunpack.c.0.s8 %v469
      %v471 = vlaneseq
      %v472 = vshrl.u32 %v471, 7
      %v473 = vsub.s32 %v470, %v472
      %v474 = vrot.slane %v467, %v473
      %476 = vst [vmem:[#allocation2] sm:$0x1] %v474
      %v478 = vcombine.high %v458, %v458
      %v480 = vunpack.c.l.s4 1966171168
      %v481 = vunpack.c.0.s8 %v480
      %v482 = vlaneseq
      %v483 = vshrl.u32 %v482, 7
      %v484 = vsub.s32 %v481, %v483
      %v485 = vrot.slane %v478, %v484
      %v487 = vunpack.c.l.s4 1966171168
      %v488 = vunpack.c.0.s8 %v487
      %v489 = vlaneseq
      %v490 = vshrl.u32 %v489, 7
      %v491 = vsub.s32 %v488, %v490
      %v492 = vrot.slane %v485, %v491
      %494 = vst [vmem:[#allocation3] sm:$0x1] %v492
      %v495 = vrot.slane %v458, 1
      %v497 = vld [vmem:[%s3] sm:$0xf]
      %v498 = vld [vmem:[%s3 + $0x4] sm:$0xf]
      %v499 = vld [vmem:[%s3 + $0x8] sm:$0xf]
      %v500 = vld [vmem:[%s3 + $0xc] sm:$0xf]
      %v501 = vld [vmem:[%s3 + $0x10] sm:$0xf]
      %v502 = vld [vmem:[%s3 + $0x14] sm:$0xf]
      %v503 = vld [vmem:[%s3 + $0x18] sm:$0xf]
      %v504 = vld [vmem:[%s3 + $0x1c] sm:$0xf]
      %v505 = vld [vmem:[%s3 + $0x20] sm:$0xf]
      %v506 = vld [vmem:[%s3 + $0x24] sm:$0xf]
      %v507 = vld [vmem:[%s3 + $0x28] sm:$0xf]
      %v508 = vld [vmem:[%s3 + $0x2c] sm:$0xf]
      %v509 = vld [vmem:[%s3 + $0x30] sm:$0xf]
      %v510 = vld [vmem:[%s3 + $0x34] sm:$0xf]
      %v511 = vld [vmem:[%s3 + $0x38] sm:$0xf]
      %v512 = vld [vmem:[%s3 + $0x3c] sm:$0xf]
      %v513 = vld [vmem:[%s3 + $0x40] sm:$0xf]
      %v514 = vld [vmem:[%s3 + $0x44] sm:$0xf]
      %v515 = vld [vmem:[%s3 + $0x48] sm:$0xf]
      %v516 = vld [vmem:[%s3 + $0x4c] sm:$0xf]
      %v517 = vld [vmem:[%s3 + $0x50] sm:$0xf]
      %v518 = vld [vmem:[%s3 + $0x54] sm:$0xf]
      %v519 = vld [vmem:[%s3 + $0x58] sm:$0xf]
      %v520 = vld [vmem:[%s3 + $0x5c] sm:$0xf]
      %v521 = vld [vmem:[%s3 + $0x60] sm:$0xf]
      %v522 = vld [vmem:[%s3 + $0x64] sm:$0xf]
      %v523 = vld [vmem:[%s3 + $0x68] sm:$0xf]
      %v524 = vld [vmem:[%s3 + $0x6c] sm:$0xf]
      %v525 = vld [vmem:[%s3 + $0x70] sm:$0xf]
      %v526 = vld [vmem:[%s3 + $0x74] sm:$0xf]
      %v527 = vld [vmem:[%s3 + $0x78] sm:$0xf]
      %v528 = vld [vmem:[%s3 + $0x7c] sm:$0xf]
      %v529 = vld [vmem:[%s4] sm:$0x1]
      %v531 = vlaneseq
      %v532 = vshrl.u32 %v531, 7
      %v533 = vsub.s32 0, %v532
      %v534 = vrot.slane %v529, %v533
      %v568 = vunpack.c.l.b16 %v497
      %v569 = vunpack.c.l.b16 %v498
      %v570 = vunpack.c.l.b16 %v499
      %v571 = vunpack.c.l.b16 %v500
      %v572 = vunpack.c.l.b16 %v501
      %v573 = vunpack.c.l.b16 %v502
      %v574 = vunpack.c.l.b16 %v503
      %v575 = vunpack.c.l.b16 %v504
      %v576 = vunpack.c.l.b16 %v505
      %v577 = vunpack.c.l.b16 %v506
      %v578 = vunpack.c.l.b16 %v507
      %v579 = vunpack.c.l.b16 %v508
      %v580 = vunpack.c.l.b16 %v509
      %v581 = vunpack.c.l.b16 %v510
      %v582 = vunpack.c.l.b16 %v511
      %v583 = vunpack.c.l.b16 %v512
      %v584 = vunpack.c.l.b16 %v513
      %v585 = vunpack.c.l.b16 %v514
      %v586 = vunpack.c.l.b16 %v515
      %v587 = vunpack.c.l.b16 %v516
      %v588 = vunpack.c.l.b16 %v517
      %v589 = vunpack.c.l.b16 %v518
      %v590 = vunpack.c.l.b16 %v519
      %v591 = vunpack.c.l.b16 %v520
      %v592 = vunpack.c.l.b16 %v521
      %v593 = vunpack.c.l.b16 %v522
      %v594 = vunpack.c.l.b16 %v523
      %v595 = vunpack.c.l.b16 %v524
      %v596 = vunpack.c.l.b16 %v525
      %v597 = vunpack.c.l.b16 %v526
      %v598 = vunpack.c.l.b16 %v527
      %v599 = vunpack.c.l.b16 %v528
      %v600 = vpack.c.b16 %v569, %v568
      %v601 = vpack.c.b16 %v571, %v570
      %v602 = vpack.c.b16 %v573, %v572
      %v603 = vpack.c.b16 %v575, %v574
      %v604 = vpack.c.b16 %v577, %v576
      %v605 = vpack.c.b16 %v579, %v578
      %v606 = vpack.c.b16 %v581, %v580
      %v607 = vpack.c.b16 %v583, %v582
      %v608 = vpack.c.b16 %v585, %v584
      %v609 = vpack.c.b16 %v587, %v586
      %v610 = vpack.c.b16 %v589, %v588
      %v611 = vpack.c.b16 %v591, %v590
      %v612 = vpack.c.b16 %v593, %v592
      %v613 = vpack.c.b16 %v595, %v594
      %v614 = vpack.c.b16 %v597, %v596
      %v615 = vpack.c.b16 %v599, %v598
      %632 = vmatprep.subr.bf16.mxu0 0
      %633 = vmatpush1.bf16.msra.mxu0 %v607
      %634 = vmatprep.subr.bf16.mxu0 0
      %635 = vmatpush1.bf16.msra.mxu0 %v606
      %636 = vmatprep.subr.bf16.mxu0 0
      %637 = vmatpush1.bf16.msra.mxu0 %v605
      %638 = vmatprep.subr.bf16.mxu0 0
      %639 = vmatpush1.bf16.msra.mxu0 %v604
      %640 = vmatprep.subr.bf16.mxu0 0
      %641 = vmatpush1.bf16.msra.mxu0 %v603
      %642 = vmatprep.subr.bf16.mxu0 0
      %643 = vmatpush1.bf16.msra.mxu0 %v602
      %644 = vmatprep.subr.bf16.mxu0 0
      %645 = vmatpush1.bf16.msra.mxu0 %v601
      %646 = vmatprep.subr.bf16.mxu0 0
      %647 = vmatpush1.bf16.msra.mxu0 %v600
      %648 = vmatprep.subr.bf16.mxu0 0
      %649 = vmatpush2.bf16.msra.mxu0 %v615
      %650 = vmatprep.subr.bf16.mxu0 0
      %651 = vmatpush2.bf16.msra.mxu0 %v614
      %652 = vmatprep.subr.bf16.mxu0 0
      %653 = vmatpush2.bf16.msra.mxu0 %v613
      %654 = vmatprep.subr.bf16.mxu0 0
      %655 = vmatpush2.bf16.msra.mxu0 %v612
      %656 = vmatprep.subr.bf16.mxu0 0
      %657 = vmatpush2.bf16.msra.mxu0 %v611
      %658 = vmatprep.subr.bf16.mxu0 0
      %659 = vmatpush2.bf16.msra.mxu0 %v610
      %660 = vmatprep.subr.bf16.mxu0 0
      %661 = vmatpush2.bf16.msra.mxu0 %v609
      %662 = vmatprep.subr.bf16.mxu0 0
      %663 = vmatpush2.bf16.msra.mxu0 %v608
      %664 = vmatprep.mubr.bf16.mxu0 %v495
      %665 = vmatmul.mubr.bf16.gmra.mxu0 %v458
      %v666 = vpop.f32.mrf.mxu0
      %v667 = vadd.f32 %v534, %v666
      %v668 = vpop.f32.mrf.mxu0
      %v669 = vpop.f32.mrf.mxu0
      %v670 = vpop.f32.mrf.mxu0
      %671 = vdwg.mxu0
      %v672 = vmax.f32 %v667, 0.0
      %v673 = vadd.f32 %v672, %v257
      %v674 = vmax.f32 %v673, 0.0
      %675 = vst [vmem:[%s255] sm:$0xff] %v674
      %p676 = scmp.lt.s32.totalorder %s20, 1
      %s677 = scalar_select %p676, %s20, 1
      %p678 = scmp.lt.s32.totalorder %s21, 1
      %s679 = scalar_select %p678, %s21, 1
      %s680 = smul.addr %s677, 2
      %s681 = sadd.s32 %s679, %s680
      %s682 = smul.addr %s681, 8
      %s683 = scalar_lea.vmem %s5, %s682
      // Predicated region
      $region45: #{tcn_forward.3} parent=39 // pred_check
        %p684 = pneg %p160
      $region46: #{tcn_forward.3} parent=39 // pred_check_branch
        %686 = sbr.rel (%p684) target = $region48
      $region47: #{tcn_forward.3} parent=39 // pred_region
        _
      $region48: #{tcn_forward.3} parent=39 // pred_fallthru
        _
    $region40: #{tcn_forward.3} parent=5 // pred_fallthru
      _
    %p687 = scmp.le.s32.totalorder 2, %s11
    // Predicated region
    $region49: #{tcn_forward.3} parent=5 // pred_check
      %p688 = pneg %p687
    $region50: #{tcn_forward.3} parent=5 // pred_check_branch
      %690 = sbr.rel (%p688) target = $region52
    $region51: #{tcn_forward.3} parent=5 // pred_region
      %s691 = ssub.s32 %s11, 2
      // Predicated region
      $region53: #{tcn_forward.3} parent=51 // pred_check
        %p692 = pneg %p166
      $region54: #{tcn_forward.3} parent=51 // pred_check_branch
        %694 = sbr.rel (%p692) target = $region56
      $region55: #{tcn_forward.3} parent=51 // pred_region
        %p695 = scmp.lt.s32.totalorder %s22, 1
        %s696 = scalar_select %p695, %s22, 1
        %p697 = scmp.lt.s32.totalorder %s23, 1
        %s698 = scalar_select %p697, %s23, 1
        %s699 = smul.addr %s696, 2
        %s700 = sadd.s32 %s698, %s699
        %s701 = smul.addr %s700, 8
        %s702 = scalar_lea.vmem %s5, %s701
      $region56: #{tcn_forward.3} parent=51 // pred_fallthru
        _
    $region52: #{tcn_forward.3} parent=5 // pred_fallthru
      _
  $region6: #{tcn_forward.3} parent=0 // loop_footer
    %s15 = sadd.s32 1, %s11
  $region7: #{tcn_forward.3} parent=0 // loop_footer_branch
    %10 = sbr.rel target = $region3
  $region8: #{tcn_forward.3} parent=0 // loop_exit
    _

// kernel: tcn_forward.2
$region0: #{tcn_forward.2}
  #allocation0 [shape = 'u32[]', space=smem, size = 0x4, offset = 0x4, fixed_abs, tag = 'smem constant byte address 0x4 - core index']
  #allocation1 [shape = 'u32[144,128]{1,0:T(1,128)}', space=vmem, size = 0x12000, scoped, tag = 'internal scratch']
  #allocation2 [shape = 'bf16[1,128]{1,0:T(2,128)(2,1)}', space=vmem, size = 0x200, scoped, tag = 'scratch operand']
  #allocation3 [shape = 'bf16[1,128]{1,0:T(2,128)(2,1)}', space=vmem, size = 0x200, scoped, tag = 'scratch operand']
  %s0 = inlined_call_operand.vmem [shape: f32[2,16,128], index: 0, kind: input, shape index: {}]
  %s1 = inlined_call_operand.vmem [shape: bf16[256,128], index: 1, kind: input, shape index: {}]
  %s2 = inlined_call_operand.vmem [shape: f32[1,128], index: 2, kind: input, shape index: {}]
  %s3 = inlined_call_operand.vmem [shape: bf16[256,128], index: 3, kind: input, shape index: {}]
  %s4 = inlined_call_operand.vmem [shape: f32[1,128], index: 4, kind: input, shape index: {}]
  %s5 = inlined_call_operand.vmem [shape: bf16[128,128], index: 5, kind: input, shape index: {}]
  %s6 = inlined_call_operand.vmem [shape: f32[1,128], index: 6, kind: input, shape index: {}]
  %s7 = inlined_call_operand.vmem [shape: f32[2,16,128], index: 7, kind: output, shape index: {}]
  %s8 = sld [smem:[#allocation0]]
  $region65: #{tcn_forward.2} parent=0
    _
  %s10 = ssub.s32 1, %s8
  %s11 = scalar_select 0, %s10, %s8
  loop: start=0, step=1, limit=6
  $region2: #{tcn_forward.2} parent=0 // loop_pre_header
    _
  $region3: #{tcn_forward.2} parent=0 // loop_header
    %s13 = sphi 0, %s17
    %p14 = scmp.ge.s32.totalorder %s13, 6
    %s20 = sphi 0, %s32
    %s21 = sphi 0, %s28
    %s22 = sphi 0, %s20
    %s23 = sphi 0, %s21
    %s24 = sphi 0, %s22
    %s25 = sphi 0, %s23
    %s37 = sphi 0, %s39
    %s40 = sphi 0, %s37
    %s41 = sphi 0, %s40
    %s57 = sphi 0, %s41
    %s61 = sphi 0, %s61
    %s63 = sphi 0, %s61
    %s64 = sphi 0, %s63
    %s78 = sphi 0, %s64
    %s82 = sphi 0, %s82
    %s84 = sphi 0, %s82
    %s85 = sphi 0, %s84
    %s99 = sphi 0, %s85
    %s103 = sphi 0, %s103
    %s105 = sphi 0, %s103
    %s106 = sphi 0, %s105
    %s120 = sphi 0, %s106
    %s124 = sphi 0, %s124
    %s126 = sphi 0, %s124
    %s127 = sphi 0, %s126
    %s141 = sphi 0, %s127
    %s145 = sphi 0, %s145
    %s147 = sphi 0, %s145
    %s148 = sphi 0, %s147
    %s162 = sphi 0, %s148
    %s166 = sphi 0, %s166
    %s168 = sphi 0, %s166
    %s169 = sphi 0, %s168
    %s183 = sphi 0, %s169
    %s191 = sphi 0, %s193
    %s194 = sphi 0, %s191
    %s195 = sphi 0, %s194
    %s211 = sphi 0, %s195
  $region4: #{tcn_forward.2} parent=0 // loop_header_branch
    %16 = sbr.rel (%p14) target = $region8
  $region5: #{tcn_forward.2} parent=0 // loop_body
    %s18 = ssub.s32 %s13, 1
    %s19 = ssub.s32 %s13, 2
    %s26 = sadd.s32 1, %s21
    %p27 = scmp.ge.s32.totalorder %s26, 2
    %s28 = scalar_select %p27, 0, %s26
    %s29 = sadd.s32 1, %s20
    %s30 = scalar_select %p27, %s29, %s20
    %p31 = scmp.ge.s32.totalorder %s30, 2
    %s32 = scalar_select %p31, 0, %s30
    %s33 = ssub.s32 %s20, %s32
    %s34 = ssub.s32 %s21, %s28
    %s35 = sor.u32 %s33, %s34
    %p36 = scmp.eq.s32.totalorder %s35, 0
    %s38 = sadd.s32 %s37, 1
    %s39 = scalar_select %p36, %s37, %s38
    %p42 = pneg %p36
    %p43 = scmp.eq.s32.totalorder %s13, 3
    %p44 = por %p42, %p43
    %p45 = scmp.ne.s32.totalorder %s37, %s40
    %p46 = scmp.eq.s32.totalorder %s13, 0
    %p47 = por %p45, %p46
    %p48 = scmp.ne.s32.totalorder %s37, %s40
    %p49 = scmp.eq.s32.totalorder %s18, 3
    %p50 = por %p48, %p49
    %p51 = scmp.ne.s32.totalorder %s40, %s41
    %p52 = scmp.eq.s32.totalorder %s18, 0
    %p53 = por %p51, %p52
    %p54 = scmp.ne.s32.totalorder %s40, %s41
    %p55 = scmp.eq.s32.totalorder %s19, 3
    %p56 = por %p54, %p55
    %p58 = scmp.ne.s32.totalorder %s41, %s57
    %p59 = scmp.eq.s32.totalorder %s19, 0
    %p60 = por %p58, %p59
    %s62 = sadd.s32 %s61, 1
    %p65 = scmp.eq.s32.totalorder %s13, 3
    %p66 = scmp.ne.s32.totalorder %s61, %s63
    %p67 = scmp.eq.s32.totalorder %s13, 0
    %p68 = por %p66, %p67
    %p69 = scmp.ne.s32.totalorder %s61, %s63
    %p70 = scmp.eq.s32.totalorder %s18, 3
    %p71 = por %p69, %p70
    %p72 = scmp.ne.s32.totalorder %s63, %s64
    %p73 = scmp.eq.s32.totalorder %s18, 0
    %p74 = por %p72, %p73
    %p75 = scmp.ne.s32.totalorder %s63, %s64
    %p76 = scmp.eq.s32.totalorder %s19, 3
    %p77 = por %p75, %p76
    %p79 = scmp.ne.s32.totalorder %s64, %s78
    %p80 = scmp.eq.s32.totalorder %s19, 0
    %p81 = por %p79, %p80
    %s83 = sadd.s32 %s82, 1
    %p86 = scmp.eq.s32.totalorder %s13, 3
    %p87 = scmp.ne.s32.totalorder %s82, %s84
    %p88 = scmp.eq.s32.totalorder %s13, 0
    %p89 = por %p87, %p88
    %p90 = scmp.ne.s32.totalorder %s82, %s84
    %p91 = scmp.eq.s32.totalorder %s18, 3
    %p92 = por %p90, %p91
    %p93 = scmp.ne.s32.totalorder %s84, %s85
    %p94 = scmp.eq.s32.totalorder %s18, 0
    %p95 = por %p93, %p94
    %p96 = scmp.ne.s32.totalorder %s84, %s85
    %p97 = scmp.eq.s32.totalorder %s19, 3
    %p98 = por %p96, %p97
    %p100 = scmp.ne.s32.totalorder %s85, %s99
    %p101 = scmp.eq.s32.totalorder %s19, 0
    %p102 = por %p100, %p101
    %s104 = sadd.s32 %s103, 1
    %p107 = scmp.eq.s32.totalorder %s13, 3
    %p108 = scmp.ne.s32.totalorder %s103, %s105
    %p109 = scmp.eq.s32.totalorder %s13, 0
    %p110 = por %p108, %p109
    %p111 = scmp.ne.s32.totalorder %s103, %s105
    %p112 = scmp.eq.s32.totalorder %s18, 3
    %p113 = por %p111, %p112
    %p114 = scmp.ne.s32.totalorder %s105, %s106
    %p115 = scmp.eq.s32.totalorder %s18, 0
    %p116 = por %p114, %p115
    %p117 = scmp.ne.s32.totalorder %s105, %s106
    %p118 = scmp.eq.s32.totalorder %s19, 3
    %p119 = por %p117, %p118
    %p121 = scmp.ne.s32.totalorder %s106, %s120
    %p122 = scmp.eq.s32.totalorder %s19, 0
    %p123 = por %p121, %p122
    %s125 = sadd.s32 %s124, 1
    %p128 = scmp.eq.s32.totalorder %s13, 3
    %p129 = scmp.ne.s32.totalorder %s124, %s126
    %p130 = scmp.eq.s32.totalorder %s13, 0
    %p131 = por %p129, %p130
    %p132 = scmp.ne.s32.totalorder %s124, %s126
    %p133 = scmp.eq.s32.totalorder %s18, 3
    %p134 = por %p132, %p133
    %p135 = scmp.ne.s32.totalorder %s126, %s127
    %p136 = scmp.eq.s32.totalorder %s18, 0
    %p137 = por %p135, %p136
    %p138 = scmp.ne.s32.totalorder %s126, %s127
    %p139 = scmp.eq.s32.totalorder %s19, 3
    %p140 = por %p138, %p139
    %p142 = scmp.ne.s32.totalorder %s127, %s141
    %p143 = scmp.eq.s32.totalorder %s19, 0
    %p144 = por %p142, %p143
    %s146 = sadd.s32 %s145, 1
    %p149 = scmp.eq.s32.totalorder %s13, 3
    %p150 = scmp.ne.s32.totalorder %s145, %s147
    %p151 = scmp.eq.s32.totalorder %s13, 0
    %p152 = por %p150, %p151
    %p153 = scmp.ne.s32.totalorder %s145, %s147
    %p154 = scmp.eq.s32.totalorder %s18, 3
    %p155 = por %p153, %p154
    %p156 = scmp.ne.s32.totalorder %s147, %s148
    %p157 = scmp.eq.s32.totalorder %s18, 0
    %p158 = por %p156, %p157
    %p159 = scmp.ne.s32.totalorder %s147, %s148
    %p160 = scmp.eq.s32.totalorder %s19, 3
    %p161 = por %p159, %p160
    %p163 = scmp.ne.s32.totalorder %s148, %s162
    %p164 = scmp.eq.s32.totalorder %s19, 0
    %p165 = por %p163, %p164
    %s167 = sadd.s32 %s166, 1
    %p170 = scmp.eq.s32.totalorder %s13, 3
    %p171 = scmp.ne.s32.totalorder %s166, %s168
    %p172 = scmp.eq.s32.totalorder %s13, 0
    %p173 = por %p171, %p172
    %p174 = scmp.ne.s32.totalorder %s166, %s168
    %p175 = scmp.eq.s32.totalorder %s18, 3
    %p176 = por %p174, %p175
    %p177 = scmp.ne.s32.totalorder %s168, %s169
    %p178 = scmp.eq.s32.totalorder %s18, 0
    %p179 = por %p177, %p178
    %p180 = scmp.ne.s32.totalorder %s168, %s169
    %p181 = scmp.eq.s32.totalorder %s19, 3
    %p182 = por %p180, %p181
    %p184 = scmp.ne.s32.totalorder %s169, %s183
    %p185 = scmp.eq.s32.totalorder %s19, 0
    %p186 = por %p184, %p185
    %s187 = ssub.s32 %s20, %s32
    %s188 = ssub.s32 %s21, %s28
    %s189 = sor.u32 %s187, %s188
    %p190 = scmp.eq.s32.totalorder %s189, 0
    %s192 = sadd.s32 %s191, 1
    %s193 = scalar_select %p190, %s191, %s192
    %p196 = pneg %p190
    %p197 = scmp.eq.s32.totalorder %s13, 3
    %p198 = por %p196, %p197
    %p199 = scmp.ne.s32.totalorder %s191, %s194
    %p200 = scmp.eq.s32.totalorder %s13, 0
    %p201 = por %p199, %p200
    %p202 = scmp.ne.s32.totalorder %s191, %s194
    %p203 = scmp.eq.s32.totalorder %s18, 3
    %p204 = por %p202, %p203
    %p205 = scmp.ne.s32.totalorder %s194, %s195
    %p206 = scmp.eq.s32.totalorder %s18, 0
    %p207 = por %p205, %p206
    %p208 = scmp.ne.s32.totalorder %s194, %s195
    %p209 = scmp.eq.s32.totalorder %s19, 3
    %p210 = por %p208, %p209
    %p212 = scmp.ne.s32.totalorder %s195, %s211
    %p213 = scmp.eq.s32.totalorder %s19, 0
    %p214 = por %p212, %p213
    %p215 = scmp.le.s32.totalorder 1, %s13
    %p216 = scmp.lt.s32.totalorder %s13, 5
    %p217 = pnand %p215, %p216
    %p218 = pneg %p217
    // Predicated region
    $region9: #{tcn_forward.2} parent=5 // pred_check
      _
    $region10: #{tcn_forward.2} parent=5 // pred_check_branch
      %220 = sbr.rel (%p217) target = $region12
    $region11: #{tcn_forward.2} parent=5 // pred_region
      %s221 = ssub.s32 %s13, 1
      // Predicated region
      $region13: #{tcn_forward.2} parent=11 // pred_check
        %p222 = pneg %p74
      $region14: #{tcn_forward.2} parent=11 // pred_check_branch
        %224 = sbr.rel (%p222) target = $region16
      $region15: #{tcn_forward.2} parent=11 // pred_region
        _
      $region16: #{tcn_forward.2} parent=11 // pred_fallthru
        _
      // Predicated region
      $region17: #{tcn_forward.2} parent=11 // pred_check
        %p225 = pneg %p95
      $region18: #{tcn_forward.2} parent=11 // pred_check_branch
        %227 = sbr.rel (%p225) target = $region20
      $region19: #{tcn_forward.2} parent=11 // pred_region
        _
      $region20: #{tcn_forward.2} parent=11 // pred_fallthru
        _
      // Predicated region
      $region21: #{tcn_forward.2} parent=11 // pred_check
        %p228 = pneg %p116
      $region22: #{tcn_forward.2} parent=11 // pred_check_branch
        %230 = sbr.rel (%p228) target = $region24
      $region23: #{tcn_forward.2} parent=11 // pred_region
        _
      $region24: #{tcn_forward.2} parent=11 // pred_fallthru
        _
      // Predicated region
      $region25: #{tcn_forward.2} parent=11 // pred_check
        %p231 = pneg %p137
      $region26: #{tcn_forward.2} parent=11 // pred_check_branch
        %233 = sbr.rel (%p231) target = $region28
      $region27: #{tcn_forward.2} parent=11 // pred_region
        _
      $region28: #{tcn_forward.2} parent=11 // pred_fallthru
        _
      // Predicated region
      $region29: #{tcn_forward.2} parent=11 // pred_check
        %p234 = pneg %p158
      $region30: #{tcn_forward.2} parent=11 // pred_check_branch
        %236 = sbr.rel (%p234) target = $region32
      $region31: #{tcn_forward.2} parent=11 // pred_region
        _
      $region32: #{tcn_forward.2} parent=11 // pred_fallthru
        _
      // Predicated region
      $region33: #{tcn_forward.2} parent=11 // pred_check
        %p237 = pneg %p179
      $region34: #{tcn_forward.2} parent=11 // pred_check_branch
        %239 = sbr.rel (%p237) target = $region36
      $region35: #{tcn_forward.2} parent=11 // pred_region
        _
      $region36: #{tcn_forward.2} parent=11 // pred_fallthru
        _
    $region12: #{tcn_forward.2} parent=5 // pred_fallthru
      _
    %p240 = scmp.lt.s32.totalorder %s13, 4
    // Predicated region
    $region37: #{tcn_forward.2} parent=5 // pred_check
      %p241 = pneg %p240
    $region38: #{tcn_forward.2} parent=5 // pred_check_branch
      %243 = sbr.rel (%p241) target = $region40
    $region39: #{tcn_forward.2} parent=5 // pred_region
      // Predicated region
      $region41: #{tcn_forward.2} parent=39 // pred_check
        %p244 = pneg %p47
      $region42: #{tcn_forward.2} parent=39 // pred_check_branch
        %246 = sbr.rel (%p244) target = $region44
      $region43: #{tcn_forward.2} parent=39 // pred_region
        %p247 = scmp.lt.s32.totalorder %s20, 1
        %s248 = scalar_select %p247, %s20, 1
        %p249 = scmp.lt.s32.totalorder %s21, 1
        %s250 = scalar_select %p249, %s21, 1
        %s251 = smul.addr %s248, 2
        %s252 = sadd.s32 %s250, %s251
        %s253 = smul.addr %s252, 8
        %s254 = scalar_lea.vmem %s0, %s253
      $region44: #{tcn_forward.2} parent=39 // pred_fallthru
        _
    $region40: #{tcn_forward.2} parent=5 // pred_fallthru
      _
    %p255 = scmp.le.s32.totalorder 1, %s13
    %p256 = scmp.lt.s32.totalorder %s13, 5
    %p257 = pnand %p255, %p256
    %p258 = pneg %p257
    // Predicated region
    $region45: #{tcn_forward.2} parent=5 // pred_check
      _
    $region46: #{tcn_forward.2} parent=5 // pred_check_branch
      %260 = sbr.rel (%p257) target = $region48
    $region47: #{tcn_forward.2} parent=5 // pred_region
      %s261 = ssub.s32 %s13, 1
      %p262 = scmp.lt.s32.totalorder %s22, 1
      %s263 = scalar_select %p262, %s22, 1
      %p264 = scmp.lt.s32.totalorder %s23, 1
      %s265 = scalar_select %p264, %s23, 1
      %s266 = smul.addr %s263, 2
      %s267 = sadd.s32 %s265, %s266
      %s268 = smul.addr %s267, 8
      %s269 = scalar_lea.vmem %s0, %s268
      %p270 = pneg %p53
      %p271 = pneg %p50
      %p272 = pneg %p74
      %p273 = pneg %p71
      %p274 = pneg %p95
      %p275 = pneg %p92
      %p276 = pneg %p116
      %p277 = pneg %p113
      %p278 = pneg %p137
      %p279 = pneg %p134
      %p280 = pneg %p158
      %p281 = pneg %p155
      %p282 = pneg %p179
      %p283 = pneg %p176
      %p284 = pneg %p207
      %p285 = pneg %p204
      %p286 = scmp.lt.s32.totalorder %s22, 1
      %s287 = scalar_select %p286, %s22, 1
      %p288 = scmp.lt.s32.totalorder %s23, 1
      %s289 = scalar_select %p288, %s23, 1
      %s290 = smul.addr %s287, 2
      %s291 = sadd.s32 %s289, %s290
      %s292 = smul.addr %s291, 8
      %s293 = scalar_lea.vmem %s7, %s292
      %p294 = scmp.lt.s32.totalorder %s22, 1
      %s295 = scalar_select %p294, %s22, 1
      %p296 = scmp.lt.s32.totalorder %s23, 1
      %s297 = scalar_select %p296, %s23, 1
      %s298 = smul.addr %s295, 2
      %s299 = sadd.s32 %s297, %s298
      %s300 = smul.addr %s299, 8
      %s301 = scalar_lea.vmem %s0, %s300
      %p302 = scmp.lt.s32.totalorder %s22, 1
      %s303 = scalar_select %p302, %s22, 1
      %p304 = scmp.lt.s32.totalorder %s23, 1
      %s305 = scalar_select %p304, %s23, 1
      %s306 = smul.addr %s303, 2
      %s307 = sadd.s32 %s305, %s306
      %s308 = smul.addr %s307, 8
      %s309 = scalar_lea.vmem %s7, %s308
      %v311 = vld [vmem:[%s301] sm:$0xff]
      %v312 = vpack.c.bf16 %v311, %v311
      %p313 = scmp.eq.s32.totalorder %s23, 0
      // Predicated region
      $region49: #{tcn_forward.2} parent=47 // pred_check
        %p314 = pneg %p313
      $region50: #{tcn_forward.2} parent=47 // pred_check_branch
        %316 = sbr.rel (%p314) target = $region52
      $region51: #{tcn_forward.2} parent=47 // pred_region
        %vm317 = vcmask 1040384
        %vm318 = vsmask.f32 256
        %vm319 = vmand %vm317, %vm318
        %v320 = vld [vmem:[#allocation2] sm:$0x1]
        %v321 = vsel %vm319, 0, %v320
        %322 = vst [vmem:[#allocation2] sm:$0x1] %v321
        %v323 = vld [vmem:[#allocation3] sm:$0x1]
        %v324 = vsel %vm319, 0, %v323
        %325 = vst [vmem:[#allocation3] sm:$0x1] %v324
      $region52: #{tcn_forward.2} parent=47 // pred_fallthru
        _
      %v326 = vld [vmem:[#allocation2] sm:$0x1]
      %v328 = vshrl.u32 %v312, 16
      %v330 = vrot.slane %v328, 7
      %v331 = vshll.u32 %v312, 16
      %v333 = vor.u32 %v330, %v331
      %vm335 = vcmask 1040384
      %vm336 = vsmask.f32 256
      %vm337 = vmand %vm335, %vm336
      %v338 = vsel %vm337, %v326, %v333
      %v340 = vshrl.u32 %v338, 16
      %v342 = vshll.u32 %v338, 16
      %v344 = vrot.slane %v342, 1
      %v345 = vor.u32 %v340, %v344
      %v347 = vld [vmem:[%s1] sm:$0xf]
      %v348 = vld [vmem:[%s1 + $0x4] sm:$0xf]
      %v349 = vld [vmem:[%s1 + $0x8] sm:$0xf]
      %v350 = vld [vmem:[%s1 + $0xc] sm:$0xf]
      %v351 = vld [vmem:[%s1 + $0x10] sm:$0xf]
      %v352 = vld [vmem:[%s1 + $0x14] sm:$0xf]
      %v353 = vld [vmem:[%s1 + $0x18] sm:$0xf]
      %v354 = vld [vmem:[%s1 + $0x1c] sm:$0xf]
      %v355 = vld [vmem:[%s1 + $0x20] sm:$0xf]
      %v356 = vld [vmem:[%s1 + $0x24] sm:$0xf]
      %v357 = vld [vmem:[%s1 + $0x28] sm:$0xf]
      %v358 = vld [vmem:[%s1 + $0x2c] sm:$0xf]
      %v359 = vld [vmem:[%s1 + $0x30] sm:$0xf]
      %v360 = vld [vmem:[%s1 + $0x34] sm:$0xf]
      %v361 = vld [vmem:[%s1 + $0x38] sm:$0xf]
      %v362 = vld [vmem:[%s1 + $0x3c] sm:$0xf]
      %v363 = vld [vmem:[%s1 + $0x40] sm:$0xf]
      %v364 = vld [vmem:[%s1 + $0x44] sm:$0xf]
      %v365 = vld [vmem:[%s1 + $0x48] sm:$0xf]
      %v366 = vld [vmem:[%s1 + $0x4c] sm:$0xf]
      %v367 = vld [vmem:[%s1 + $0x50] sm:$0xf]
      %v368 = vld [vmem:[%s1 + $0x54] sm:$0xf]
      %v369 = vld [vmem:[%s1 + $0x58] sm:$0xf]
      %v370 = vld [vmem:[%s1 + $0x5c] sm:$0xf]
      %v371 = vld [vmem:[%s1 + $0x60] sm:$0xf]
      %v372 = vld [vmem:[%s1 + $0x64] sm:$0xf]
      %v373 = vld [vmem:[%s1 + $0x68] sm:$0xf]
      %v374 = vld [vmem:[%s1 + $0x6c] sm:$0xf]
      %v375 = vld [vmem:[%s1 + $0x70] sm:$0xf]
      %v376 = vld [vmem:[%s1 + $0x74] sm:$0xf]
      %v377 = vld [vmem:[%s1 + $0x78] sm:$0xf]
      %v378 = vld [vmem:[%s1 + $0x7c] sm:$0xf]
      %v379 = vld [vmem:[%s2] sm:$0x1]
      %v381 = vlaneseq
      %v382 = vshrl.u32 %v381, 7
      %v383 = vsub.s32 0, %v382
      %v384 = vrot.slane %v379, %v383
      %v418 = vunpack.c.l.b16 %v347
      %v419 = vunpack.c.l.b16 %v348
      %v420 = vunpack.c.l.b16 %v349
      %v421 = vunpack.c.l.b16 %v350
      %v422 = vunpack.c.l.b16 %v351
      %v423 = vunpack.c.l.b16 %v352
      %v424 = vunpack.c.l.b16 %v353
      %v425 = vunpack.c.l.b16 %v354
      %v426 = vunpack.c.l.b16 %v355
      %v427 = vunpack.c.l.b16 %v356
      %v428 = vunpack.c.l.b16 %v357
      %v429 = vunpack.c.l.b16 %v358
      %v430 = vunpack.c.l.b16 %v359
      %v431 = vunpack.c.l.b16 %v360
      %v432 = vunpack.c.l.b16 %v361
      %v433 = vunpack.c.l.b16 %v362
      %v434 = vunpack.c.l.b16 %v363
      %v435 = vunpack.c.l.b16 %v364
      %v436 = vunpack.c.l.b16 %v365
      %v437 = vunpack.c.l.b16 %v366
      %v438 = vunpack.c.l.b16 %v367
      %v439 = vunpack.c.l.b16 %v368
      %v440 = vunpack.c.l.b16 %v369
      %v441 = vunpack.c.l.b16 %v370
      %v442 = vunpack.c.l.b16 %v371
      %v443 = vunpack.c.l.b16 %v372
      %v444 = vunpack.c.l.b16 %v373
      %v445 = vunpack.c.l.b16 %v374
      %v446 = vunpack.c.l.b16 %v375
      %v447 = vunpack.c.l.b16 %v376
      %v448 = vunpack.c.l.b16 %v377
      %v449 = vunpack.c.l.b16 %v378
      %v450 = vpack.c.b16 %v419, %v418
      %v451 = vpack.c.b16 %v421, %v420
      %v452 = vpack.c.b16 %v423, %v422
      %v453 = vpack.c.b16 %v425, %v424
      %v454 = vpack.c.b16 %v427, %v426
      %v455 = vpack.c.b16 %v429, %v428
      %v456 = vpack.c.b16 %v431, %v430
      %v457 = vpack.c.b16 %v433, %v432
      %v458 = vpack.c.b16 %v435, %v434
      %v459 = vpack.c.b16 %v437, %v436
      %v460 = vpack.c.b16 %v439, %v438
      %v461 = vpack.c.b16 %v441, %v440
      %v462 = vpack.c.b16 %v443, %v442
      %v463 = vpack.c.b16 %v445, %v444
      %v464 = vpack.c.b16 %v447, %v446
      %v465 = vpack.c.b16 %v449, %v448
      %482 = vmatprep.subr.bf16.mxu0 0
      %483 = vmatpush1.bf16.msra.mxu0 %v457
      %484 = vmatprep.subr.bf16.mxu0 0
      %485 = vmatpush1.bf16.msra.mxu0 %v456
      %486 = vmatprep.subr.bf16.mxu0 0
      %487 = vmatpush1.bf16.msra.mxu0 %v455
      %488 = vmatprep.subr.bf16.mxu0 0
      %489 = vmatpush1.bf16.msra.mxu0 %v454
      %490 = vmatprep.subr.bf16.mxu0 0
      %491 = vmatpush1.bf16.msra.mxu0 %v453
      %492 = vmatprep.subr.bf16.mxu0 0
      %493 = vmatpush1.bf16.msra.mxu0 %v452
      %494 = vmatprep.subr.bf16.mxu0 0
      %495 = vmatpush1.bf16.msra.mxu0 %v451
      %496 = vmatprep.subr.bf16.mxu0 0
      %497 = vmatpush1.bf16.msra.mxu0 %v450
      %498 = vmatprep.subr.bf16.mxu0 0
      %499 = vmatpush2.bf16.msra.mxu0 %v465
      %500 = vmatprep.subr.bf16.mxu0 0
      %501 = vmatpush2.bf16.msra.mxu0 %v464
      %502 = vmatprep.subr.bf16.mxu0 0
      %503 = vmatpush2.bf16.msra.mxu0 %v463
      %504 = vmatprep.subr.bf16.mxu0 0
      %505 = vmatpush2.bf16.msra.mxu0 %v462
      %506 = vmatprep.subr.bf16.mxu0 0
      %507 = vmatpush2.bf16.msra.mxu0 %v461
      %508 = vmatprep.subr.bf16.mxu0 0
      %509 = vmatpush2.bf16.msra.mxu0 %v460
      %510 = vmatprep.subr.bf16.mxu0 0
      %511 = vmatpush2.bf16.msra.mxu0 %v459
      %512 = vmatprep.subr.bf16.mxu0 0
      %513 = vmatpush2.bf16.msra.mxu0 %v458
      %514 = vmatprep.mubr.bf16.mxu0 %v345
      %515 = vmatmul.mubr.bf16.gmra.mxu0 %v338
      %v516 = vpop.f32.mrf.mxu0
      %v517 = vadd.f32 %v384, %v516
      %v518 = vpop.f32.mrf.mxu0
      %v519 = vpop.f32.mrf.mxu0
      %v520 = vpop.f32.mrf.mxu0
      %521 = vdwg.mxu0
      %v522 = vmax.f32 %v517, 0.0
      %v523 = vpack.c.bf16 %v522, %v522
      %v524 = vld [vmem:[#allocation3] sm:$0x1]
      %v526 = vshrl.u32 %v523, 16
      %v528 = vrot.slane %v526, 7
      %v529 = vshll.u32 %v523, 16
      %v531 = vor.u32 %v528, %v529
      %v533 = vsel %vm337, %v524, %v531
      %v535 = vcombine.high %v338, %v338
      %v537 = vunpack.c.l.s4 1966171168
      %v538 = vunpack.c.0.s8 %v537
      %v539 = vlaneseq
      %v540 = vshrl.u32 %v539, 7
      %v541 = vsub.s32 %v538, %v540
      %v542 = vrot.slane %v535, %v541
      %v544 = vunpack.c.l.s4 1966171168
      %v545 = vunpack.c.0.s8 %v544
      %v546 = vlaneseq
      %v547 = vshrl.u32 %v546, 7
      %v548 = vsub.s32 %v545, %v547
      %v549 = vrot.slane %v542, %v548
      %v551 = vld [vmem:[#allocation2] sm:$0x1]
      %v552 = vsel %vm337, %v549, %v551
      %553 = vst [vmem:[#allocation2] sm:$0x1] %v552
      %v555 = vcombine.high %v533, %v533
      %v557 = vunpack.c.l.s4 1966171168
      %v558 = vunpack.c.0.s8 %v557
      %v559 = vlaneseq
      %v560 = vshrl.u32 %v559, 7
      %v561 = vsub.s32 %v558, %v560
      %v562 = vrot.slane %v555, %v561
      %v564 = vunpack.c.l.s4 1966171168
      %v565 = vunpack.c.0.s8 %v564
      %v566 = vlaneseq
      %v567 = vshrl.u32 %v566, 7
      %v568 = vsub.s32 %v565, %v567
      %v569 = vrot.slane %v562, %v568
      %v571 = vld [vmem:[#allocation3] sm:$0x1]
      %v572 = vsel %vm337, %v569, %v571
      %573 = vst [vmem:[#allocation3] sm:$0x1] %v572
      %v575 = vshrl.u32 %v533, 16
      %v577 = vshll.u32 %v533, 16
      %v579 = vrot.slane %v577, 1
      %v580 = vor.u32 %v575, %v579
      %v582 = vld [vmem:[%s3] sm:$0xf]
      %v583 = vld [vmem:[%s3 + $0x4] sm:$0xf]
      %v584 = vld [vmem:[%s3 + $0x8] sm:$0xf]
      %v585 = vld [vmem:[%s3 + $0xc] sm:$0xf]
      %v586 = vld [vmem:[%s3 + $0x10] sm:$0xf]
      %v587 = vld [vmem:[%s3 + $0x14] sm:$0xf]
      %v588 = vld [vmem:[%s3 + $0x18] sm:$0xf]
      %v589 = vld [vmem:[%s3 + $0x1c] sm:$0xf]
      %v590 = vld [vmem:[%s3 + $0x20] sm:$0xf]
      %v591 = vld [vmem:[%s3 + $0x24] sm:$0xf]
      %v592 = vld [vmem:[%s3 + $0x28] sm:$0xf]
      %v593 = vld [vmem:[%s3 + $0x2c] sm:$0xf]
      %v594 = vld [vmem:[%s3 + $0x30] sm:$0xf]
      %v595 = vld [vmem:[%s3 + $0x34] sm:$0xf]
      %v596 = vld [vmem:[%s3 + $0x38] sm:$0xf]
      %v597 = vld [vmem:[%s3 + $0x3c] sm:$0xf]
      %v598 = vld [vmem:[%s3 + $0x40] sm:$0xf]
      %v599 = vld [vmem:[%s3 + $0x44] sm:$0xf]
      %v600 = vld [vmem:[%s3 + $0x48] sm:$0xf]
      %v601 = vld [vmem:[%s3 + $0x4c] sm:$0xf]
      %v602 = vld [vmem:[%s3 + $0x50] sm:$0xf]
      %v603 = vld [vmem:[%s3 + $0x54] sm:$0xf]
      %v604 = vld [vmem:[%s3 + $0x58] sm:$0xf]
      %v605 = vld [vmem:[%s3 + $0x5c] sm:$0xf]
      %v606 = vld [vmem:[%s3 + $0x60] sm:$0xf]
      %v607 = vld [vmem:[%s3 + $0x64] sm:$0xf]
      %v608 = vld [vmem:[%s3 + $0x68] sm:$0xf]
      %v609 = vld [vmem:[%s3 + $0x6c] sm:$0xf]
      %v610 = vld [vmem:[%s3 + $0x70] sm:$0xf]
      %v611 = vld [vmem:[%s3 + $0x74] sm:$0xf]
      %v612 = vld [vmem:[%s3 + $0x78] sm:$0xf]
      %v613 = vld [vmem:[%s3 + $0x7c] sm:$0xf]
      %v614 = vld [vmem:[%s4] sm:$0x1]
      %v616 = vlaneseq
      %v617 = vshrl.u32 %v616, 7
      %v618 = vsub.s32 0, %v617
      %v619 = vrot.slane %v614, %v618
      %v653 = vunpack.c.l.b16 %v582
      %v654 = vunpack.c.l.b16 %v583
      %v655 = vunpack.c.l.b16 %v584
      %v656 = vunpack.c.l.b16 %v585
      %v657 = vunpack.c.l.b16 %v586
      %v658 = vunpack.c.l.b16 %v587
      %v659 = vunpack.c.l.b16 %v588
      %v660 = vunpack.c.l.b16 %v589
      %v661 = vunpack.c.l.b16 %v590
      %v662 = vunpack.c.l.b16 %v591
      %v663 = vunpack.c.l.b16 %v592
      %v664 = vunpack.c.l.b16 %v593
      %v665 = vunpack.c.l.b16 %v594
      %v666 = vunpack.c.l.b16 %v595
      %v667 = vunpack.c.l.b16 %v596
      %v668 = vunpack.c.l.b16 %v597
      %v669 = vunpack.c.l.b16 %v598
      %v670 = vunpack.c.l.b16 %v599
      %v671 = vunpack.c.l.b16 %v600
      %v672 = vunpack.c.l.b16 %v601
      %v673 = vunpack.c.l.b16 %v602
      %v674 = vunpack.c.l.b16 %v603
      %v675 = vunpack.c.l.b16 %v604
      %v676 = vunpack.c.l.b16 %v605
      %v677 = vunpack.c.l.b16 %v606
      %v678 = vunpack.c.l.b16 %v607
      %v679 = vunpack.c.l.b16 %v608
      %v680 = vunpack.c.l.b16 %v609
      %v681 = vunpack.c.l.b16 %v610
      %v682 = vunpack.c.l.b16 %v611
      %v683 = vunpack.c.l.b16 %v612
      %v684 = vunpack.c.l.b16 %v613
      %v685 = vpack.c.b16 %v654, %v653
      %v686 = vpack.c.b16 %v656, %v655
      %v687 = vpack.c.b16 %v658, %v657
      %v688 = vpack.c.b16 %v660, %v659
      %v689 = vpack.c.b16 %v662, %v661
      %v690 = vpack.c.b16 %v664, %v663
      %v691 = vpack.c.b16 %v666, %v665
      %v692 = vpack.c.b16 %v668, %v667
      %v693 = vpack.c.b16 %v670, %v669
      %v694 = vpack.c.b16 %v672, %v671
      %v695 = vpack.c.b16 %v674, %v673
      %v696 = vpack.c.b16 %v676, %v675
      %v697 = vpack.c.b16 %v678, %v677
      %v698 = vpack.c.b16 %v680, %v679
      %v699 = vpack.c.b16 %v682, %v681
      %v700 = vpack.c.b16 %v684, %v683
      %717 = vmatprep.subr.bf16.mxu0 0
      %718 = vmatpush1.bf16.msra.mxu0 %v692
      %719 = vmatprep.subr.bf16.mxu0 0
      %720 = vmatpush1.bf16.msra.mxu0 %v691
      %721 = vmatprep.subr.bf16.mxu0 0
      %722 = vmatpush1.bf16.msra.mxu0 %v690
      %723 = vmatprep.subr.bf16.mxu0 0
      %724 = vmatpush1.bf16.msra.mxu0 %v689
      %725 = vmatprep.subr.bf16.mxu0 0
      %726 = vmatpush1.bf16.msra.mxu0 %v688
      %727 = vmatprep.subr.bf16.mxu0 0
      %728 = vmatpush1.bf16.msra.mxu0 %v687
      %729 = vmatprep.subr.bf16.mxu0 0
      %730 = vmatpush1.bf16.msra.mxu0 %v686
      %731 = vmatprep.subr.bf16.mxu0 0
      %732 = vmatpush1.bf16.msra.mxu0 %v685
      %733 = vmatprep.subr.bf16.mxu0 0
      %734 = vmatpush2.bf16.msra.mxu0 %v700
      %735 = vmatprep.subr.bf16.mxu0 0
      %736 = vmatpush2.bf16.msra.mxu0 %v699
      %737 = vmatprep.subr.bf16.mxu0 0
      %738 = vmatpush2.bf16.msra.mxu0 %v698
      %739 = vmatprep.subr.bf16.mxu0 0
      %740 = vmatpush2.bf16.msra.mxu0 %v697
      %741 = vmatprep.subr.bf16.mxu0 0
      %742 = vmatpush2.bf16.msra.mxu0 %v696
      %743 = vmatprep.subr.bf16.mxu0 0
      %744 = vmatpush2.bf16.msra.mxu0 %v695
      %745 = vmatprep.subr.bf16.mxu0 0
      %746 = vmatpush2.bf16.msra.mxu0 %v694
      %747 = vmatprep.subr.bf16.mxu0 0
      %748 = vmatpush2.bf16.msra.mxu0 %v693
      %749 = vmatprep.mubr.bf16.mxu0 %v580
      %750 = vmatmul.mubr.bf16.gmra.mxu0 %v533
      %v751 = vpop.f32.mrf.mxu0
      %v752 = vadd.f32 %v619, %v751
      %v753 = vpop.f32.mrf.mxu0
      %v754 = vpop.f32.mrf.mxu0
      %v755 = vpop.f32.mrf.mxu0
      %756 = vdwg.mxu0
      %v757 = vmax.f32 %v752, 0.0
      %v758 = vld [vmem:[%s5] sm:$0xf]
      %v759 = vld [vmem:[%s5 + $0x4] sm:$0xf]
      %v760 = vld [vmem:[%s5 + $0x8] sm:$0xf]
      %v761 = vld [vmem:[%s5 + $0xc] sm:$0xf]
      %v762 = vld [vmem:[%s5 + $0x10] sm:$0xf]
      %v763 = vld [vmem:[%s5 + $0x14] sm:$0xf]
      %v764 = vld [vmem:[%s5 + $0x18] sm:$0xf]
      %v765 = vld [vmem:[%s5 + $0x1c] sm:$0xf]
      %v766 = vld [vmem:[%s5 + $0x20] sm:$0xf]
      %v767 = vld [vmem:[%s5 + $0x24] sm:$0xf]
      %v768 = vld [vmem:[%s5 + $0x28] sm:$0xf]
      %v769 = vld [vmem:[%s5 + $0x2c] sm:$0xf]
      %v770 = vld [vmem:[%s5 + $0x30] sm:$0xf]
      %v771 = vld [vmem:[%s5 + $0x34] sm:$0xf]
      %v772 = vld [vmem:[%s5 + $0x38] sm:$0xf]
      %v773 = vld [vmem:[%s5 + $0x3c] sm:$0xf]
      %v774 = vld [vmem:[%s6] sm:$0x1]
      %v776 = vlaneseq
      %v777 = vshrl.u32 %v776, 7
      %v778 = vsub.s32 0, %v777
      %v779 = vrot.slane %v774, %v778
      %v797 = vunpack.c.l.b16 %v758
      %v798 = vunpack.c.l.b16 %v759
      %v799 = vunpack.c.l.b16 %v760
      %v800 = vunpack.c.l.b16 %v761
      %v801 = vunpack.c.l.b16 %v762
      %v802 = vunpack.c.l.b16 %v763
      %v803 = vunpack.c.l.b16 %v764
      %v804 = vunpack.c.l.b16 %v765
      %v805 = vunpack.c.l.b16 %v766
      %v806 = vunpack.c.l.b16 %v767
      %v807 = vunpack.c.l.b16 %v768
      %v808 = vunpack.c.l.b16 %v769
      %v809 = vunpack.c.l.b16 %v770
      %v810 = vunpack.c.l.b16 %v771
      %v811 = vunpack.c.l.b16 %v772
      %v812 = vunpack.c.l.b16 %v773
      %v813 = vpack.c.b16 %v798, %v797
      %v814 = vpack.c.b16 %v800, %v799
      %v815 = vpack.c.b16 %v802, %v801
      %v816 = vpack.c.b16 %v804, %v803
      %v817 = vpack.c.b16 %v806, %v805
      %v818 = vpack.c.b16 %v808, %v807
      %v819 = vpack.c.b16 %v810, %v809
      %v820 = vpack.c.b16 %v812, %v811
      %829 = vmatprep.subr.bf16.mxu0 0
      %830 = vmatpush1.bf16.msra.mxu0 %v820
      %831 = vmatprep.subr.bf16.mxu0 0
      %832 = vmatpush1.bf16.msra.mxu0 %v819
      %833 = vmatprep.subr.bf16.mxu0 0
      %834 = vmatpush1.bf16.msra.mxu0 %v818
      %835 = vmatprep.subr.bf16.mxu0 0
      %836 = vmatpush1.bf16.msra.mxu0 %v817
      %837 = vmatprep.subr.bf16.mxu0 0
      %838 = vmatpush1.bf16.msra.mxu0 %v816
      %839 = vmatprep.subr.bf16.mxu0 0
      %840 = vmatpush1.bf16.msra.mxu0 %v815
      %841 = vmatprep.subr.bf16.mxu0 0
      %842 = vmatpush1.bf16.msra.mxu0 %v814
      %843 = vmatprep.subr.bf16.mxu0 0
      %844 = vmatpush1.bf16.msra.mxu0 %v813
      %845 = vmatprep.subr.bf16.mxu0 0
      %846 = vmatpush2.bf16.msra.mxu0 0
      %847 = vmatprep.subr.bf16.mxu0 0
      %848 = vmatpush2.bf16.msra.mxu0 0
      %849 = vmatprep.subr.bf16.mxu0 0
      %850 = vmatpush2.bf16.msra.mxu0 0
      %851 = vmatprep.subr.bf16.mxu0 0
      %852 = vmatpush2.bf16.msra.mxu0 0
      %853 = vmatprep.subr.bf16.mxu0 0
      %854 = vmatpush2.bf16.msra.mxu0 0
      %855 = vmatprep.subr.bf16.mxu0 0
      %856 = vmatpush2.bf16.msra.mxu0 0
      %857 = vmatprep.subr.bf16.mxu0 0
      %858 = vmatpush2.bf16.msra.mxu0 0
      %859 = vmatprep.subr.bf16.mxu0 0
      %860 = vmatpush2.bf16.msra.mxu0 0
      %861 = vmatprep.mubr.bf16.mxu0 0
      %862 = vmatmul.mubr.bf16.gmra.mxu0 %v312
      %v863 = vpop.f32.mrf.mxu0
      %v864 = vadd.f32 %v779, %v863
      %v865 = vpop.f32.mrf.mxu0
      %v866 = vpop.f32.mrf.mxu0
      %v867 = vpop.f32.mrf.mxu0
      %868 = vdwg.mxu0
      %v869 = vadd.f32 %v757, %v864
      %v870 = vmax.f32 %v869, 0.0
      %871 = vst [vmem:[%s309] sm:$0xff] %v870
      %p872 = scmp.lt.s32.totalorder %s22, 1
      %s873 = scalar_select %p872, %s22, 1
      %p874 = scmp.lt.s32.totalorder %s23, 1
      %s875 = scalar_select %p874, %s23, 1
      %s876 = smul.addr %s873, 2
      %s877 = sadd.s32 %s875, %s876
      %s878 = smul.addr %s877, 8
      %s879 = scalar_lea.vmem %s7, %s878
      // Predicated region
      $region53: #{tcn_forward.2} parent=47 // pred_check
        %p880 = pneg %p204
      $region54: #{tcn_forward.2} parent=47 // pred_check_branch
        %882 = sbr.rel (%p880) target = $region56
      $region55: #{tcn_forward.2} parent=47 // pred_region
        _
      $region56: #{tcn_forward.2} parent=47 // pred_fallthru
        _
    $region48: #{tcn_forward.2} parent=5 // pred_fallthru
      _
    %p883 = scmp.le.s32.totalorder 2, %s13
    // Predicated region
    $region57: #{tcn_forward.2} parent=5 // pred_check
      %p884 = pneg %p883
    $region58: #{tcn_forward.2} parent=5 // pred_check_branch
      %886 = sbr.rel (%p884) target = $region60
    $region59: #{tcn_forward.2} parent=5 // pred_region
      %s887 = ssub.s32 %s13, 2
      // Predicated region
      $region61: #{tcn_forward.2} parent=59 // pred_check
        %p888 = pneg %p210
      $region62: #{tcn_forward.2} parent=59 // pred_check_branch
        %890 = sbr.rel (%p888) target = $region64
      $region63: #{tcn_forward.2} parent=59 // pred_region
        %p891 = scmp.lt.s32.totalorder %s24, 1
        %s892 = scalar_select %p891, %s24, 1
        %p893 = scmp.lt.s32.totalorder %s25, 1
        %s894 = scalar_select %p893, %s25, 1
        %s895 = smul.addr %s892, 2
        %s896 = sadd.s32 %s894, %s895
        %s897 = smul.addr %s896, 8
        %s898 = scalar_lea.vmem %s7, %s897
      $region64: #{tcn_forward.2} parent=59 // pred_fallthru
        _
    $region60: #{tcn_forward.2} parent=5 // pred_fallthru
      _
  $region6: #{tcn_forward.2} parent=0 // loop_footer
    %s17 = sadd.s32 1, %s13
  $region7: #{tcn_forward.2} parent=0 // loop_footer_branch
    %12 = sbr.rel target = $region3
  $region8: #{tcn_forward.2} parent=0 // loop_exit
    _

</llo_original>
